<compile_context>
chip_gen: v6e
topology: v6e:2x2x1
jax: 0.10.0
libtpu: 0.0.40
codegen_flags: <defaults>
</compile_context>

<pallas_src>
import functools

import jax
import jax.numpy as jnp
from jax import lax
from jax.experimental import pallas as pl
from jax.experimental.pallas import tpu as pltpu

BN_EPS = 1e-5
DROP_P = 0.2
_VMEM_BUDGET = 12 * 1024 * 1024  # conservative: inside v5e's 16 MiB scoped default


# ---------------------------------------------------------------------------
# helpers
# ---------------------------------------------------------------------------
def _to_i32(v):
    v = int(v) & 0xFFFFFFFF
    if v >= 1 << 31:
        v -= 1 << 32
    return v


def _pick_rows_per_group(h, wp, cin, cout, budget=_VMEM_BUDGET):
    """Largest row-group height th (dividing H) whose double-buffered working set fits VMEM."""
    for th in range(h, 0, -1):
        if h % th != 0:
            continue
        tl = th * wp
        lg2 = (th + 2) * wp + 2
        per_step = 2 * (cin * lg2 * 2 + 2 * cout * tl * 2)      # xg + conv_raw + y, 2-buffered
        fixed = 9 * cout * cin * 2 + tl * 4 + cout * 2 * 4       # weights + colmask + affine
        if per_step + fixed <= budget:
            return th
    return 1


# ---------------------------------------------------------------------------
# kernels
# ---------------------------------------------------------------------------
def _conv_stats_kernel(xg_ref, w_ref, mask_ref, conv_ref, stats_ref, *, wp, tl):
    # xg_ref:   (C, Lg2)      bf16 halo'd, zero-padded, flattened row group (+1 guard each end)
    # w_ref:    (9, Cout, C)  bf16, tap t = kh*3 + kw
    # mask_ref: (1, tl)       f32, 1.0 on valid (non width-pad) columns
    # conv_ref: (Cout, tl)    bf16 raw conv tile, lane-dense, pad columns zeroed
    # stats_ref:(Cout, 2)     f32 per-sample resident accumulator [sum, sum-of-squares]
    acc = None
    for kh in range(3):
        for kw in range(3):
            start = kh * wp + kw
            tap = xg_ref[:, start:start + tl]                       # (C, tl), VMEM read only
            part = jnp.dot(w_ref[kh * 3 + kw], tap,
                           preferred_element_type=jnp.float32)      # bf16 x bf16 -> f32 on MXU
            acc = part if acc is None else acc + part
    acc = acc * mask_ref[...]                                        # zero width-pad columns
    conv_ref[...] = acc.astype(conv_ref.dtype)

    # single fused (Cout, 2) stats update, taken from the f32 accumulator (pre-downcast)
    upd = jnp.concatenate(
        [jnp.sum(acc, axis=1, keepdims=True),
         jnp.sum(acc * acc, axis=1, keepdims=True)], axis=1)

    @pl.when(pl.program_id(1) == 0)
    def _init():
        stats_ref[...] = jnp.zeros_like(stats_ref)

    stats_ref[...] += upd


def _affine_relu_kernel(conv_ref, aff_ref, mask_ref, out_ref):
    x = conv_ref[...].astype(jnp.float32)
    y = jnp.maximum(x * aff_ref[:, 0:1] + aff_ref[:, 1:2], 0.0) * mask_ref[...]
    out_ref[...] = y.astype(out_ref.dtype)


def _srl(v, k):
    # logical right shift, shape-safe for lax on both TPU and interpret mode
    return lax.shift_right_logical(v, jnp.full(v.shape, k, v.dtype))


def _affine_relu_dropout_kernel(conv_ref, aff_ref, mask_ref, out_ref, *, seed, keep_prob):
    x = conv_ref[...].astype(jnp.float32)
    y = jnp.maximum(x * aff_ref[:, 0:1] + aff_ref[:, 1:2], 0.0) * mask_ref[...]

    rows, cols = y.shape
    # Deterministic per-element random bits from a splitmix32-style integer hash
    # (replaces pltpu.prng_* which has no CPU-interpret lowering). int32 multiplies wrap.
    step = pl.program_id(0) * pl.num_programs(1) + pl.program_id(1)
    base = step * jnp.int32(_to_i32(rows * cols)) + jnp.int32(_to_i32(seed * 0x9E3779B1))
    r = lax.broadcasted_iota(jnp.int32, y.shape, 0)
    c = lax.broadcasted_iota(jnp.int32, y.shape, 1)
    h = base + r * jnp.int32(cols) + c
    h = (h ^ _srl(h, 16)) * jnp.int32(_to_i32(0x7FEB352D))
    h = (h ^ _srl(h, 15)) * jnp.int32(_to_i32(0x846CA68B))
    h = h ^ _srl(h, 16)
    r24 = _srl(h, 8)                                        # uniform integer in [0, 2^24)
    keep = r24 < jnp.int32(int(round(keep_prob * (1 << 24))))
    out_ref[...] = jnp.where(keep, y * (1.0 / keep_prob), 0.0).astype(out_ref.dtype)


# ---------------------------------------------------------------------------
# pallas_call drivers
# ---------------------------------------------------------------------------
def _conv_bn_stats(xg, wt, colmask, *, cout, tl, wp):
    n, g, cin, lg2 = xg.shape
    kernel = functools.partial(_conv_stats_kernel, wp=wp, tl=tl)
    return pl.pallas_call(
        kernel,
        out_shape=(jax.ShapeDtypeStruct((n, g, cout, tl), jnp.bfloat16),
                   jax.ShapeDtypeStruct((n, cout, 2), jnp.float32)),
        grid=(n, g),
        in_specs=[
            pl.BlockSpec((None, None, cin, lg2), lambda i, j: (i, j, 0, 0)),
            pl.BlockSpec((9, cout, cin), lambda i, j: (0, 0, 0)),
            pl.BlockSpec((1, tl), lambda i, j: (0, 0)),
        ],
        out_specs=(
            pl.BlockSpec((None, None, cout, tl), lambda i, j: (i, j, 0, 0)),
            pl.BlockSpec((None, cout, 2), lambda i, j: (i, 0, 0)),   # per-sample partial stats
        ),
        compiler_params=pltpu.CompilerParams(
            dimension_semantics=("parallel", "arbitrary")),
    )(xg, wt, colmask)


def _bn_relu_apply(conv_raw, affine, colmask, *, out_dtype, seed=None, keep_prob=1.0):
    n, g, cout, tl = conv_raw.shape
    if seed is None:
        kernel = _affine_relu_kernel
    else:
        kernel = functools.partial(_affine_relu_dropout_kernel,
                                   seed=int(seed), keep_prob=float(keep_prob))
    return pl.pallas_call(
        kernel,
        out_shape=jax.ShapeDtypeStruct((n, g, cout, tl), out_dtype),
        grid=(n, g),
        in_specs=[
            pl.BlockSpec((None, None, cout, tl), lambda i, j: (i, j, 0, 0)),
            pl.BlockSpec((cout, 2), lambda i, j: (0, 0)),
            pl.BlockSpec((1, tl), lambda i, j: (0, 0)),
        ],
        out_specs=pl.BlockSpec((None, None, cout, tl), lambda i, j: (i, j, 0, 0)),
        compiler_params=pltpu.CompilerParams(
            dimension_semantics=("parallel", "parallel")),
    )(conv_raw, affine, colmask)


def _affine_from_stats(stats, gamma, beta, count):
    tot = jnp.sum(stats, axis=0)                      # reduce per-sample partials -> (Cout, 2)
    mean = tot[:, 0] / count
    var = jnp.maximum(tot[:, 1] / count - mean * mean, 0.0)
    scale = gamma * lax.rsqrt(var + BN_EPS)
    shift = beta - mean * scale
    return jnp.stack([scale, shift], axis=1).astype(jnp.float32)


# ---------------------------------------------------------------------------
# one conv->BN->ReLU(->dropout) stage
# ---------------------------------------------------------------------------
def _stage(x_int, w, gamma, beta, *, out_dtype, seed=None, keep_prob=1.0):
    """x_int: (N, C, H, Wp) 'interior' layout — width already zero-padded (cols 0, Wp-1 are 0)."""
    n, c, h, wp = x_int.shape
    wdt = wp - 2
    cout = w.shape[0]
    th = _pick_rows_per_group(h, wp, c, cout)
    g = h // th
    tl = th * wp
    lg2 = (th + 2) * wp + 2

    # halo'd row groups: rows [g*th, g*th+th+2) of the row-padded image, flattened, +1 guard/end
    xp = jnp.pad(x_int, ((0, 0), (0, 0), (1, 1), (0, 0)))
    groups = jnp.stack([xp[:, :, k * th:k * th + th + 2, :] for k in range(g)], axis=1)
    xg = groups.reshape(n, g, c, (th + 2) * wp)
    xg = jnp.pad(xg, ((0, 0), (0, 0), (0, 0), (1, 1))).astype(jnp.bfloat16)

    wt = jnp.transpose(w, (2, 3, 0, 1)).reshape(9, cout, c).astype(jnp.bfloat16)

    colmask = jnp.ones((th, wp), jnp.float32).at[:, 0].set(0.0).at[:, wp - 1].set(0.0)
    colmask = colmask.reshape(1, tl)

    conv_raw, stats = _conv_bn_stats(xg, wt, colmask, cout=cout, tl=tl, wp=wp)
    affine = _affine_from_stats(stats, gamma.astype(jnp.float32), beta.astype(jnp.float32),
                                float(n * h * wdt))
    y = _bn_relu_apply(conv_raw, affine, colmask, out_dtype=out_dtype,
                       seed=seed, keep_prob=keep_prob)

    # back to interior layout (N, Cout, H, Wp); pad columns are exact zeros (masked in-kernel)
    y = y.reshape(n, g, cout, th, wp).transpose(0, 2, 1, 3, 4).reshape(n, cout, h, wp)
    return y


# ---------------------------------------------------------------------------
# module forward
# ---------------------------------------------------------------------------
def sub_conv_horizon(x, params, *, dropout_seed=None, drop_p=DROP_P):
    """Forward of Sub_conv_horizon in training mode (batch-stat BN).

    x: (N, Cin, H, W) f32. params: w1 (C,Cin,3,3), b1, g1, be1, w2 (C,C,3,3), b2, g2, be2.
    Conv biases b1/b2 are accepted for interface fidelity but unused: they cancel exactly
    inside training-mode BatchNorm. Dropout (p=drop_p) is applied only when dropout_seed
    is an int (training); dropout_seed=None gives the eval-mode identity.
    """
    _, _, _, w = x.shape
    x_int = jnp.pad(x.astype(jnp.float32), ((0, 0), (0, 0), (0, 0), (1, 1)))
    h1 = _stage(x_int, params["w1"], params["g1"], params["be1"], out_dtype=jnp.bfloat16)
    h2 = _stage(h1, params["w2"], params["g2"], params["be2"], out_dtype=jnp.float32,
                seed=dropout_seed, keep_prob=1.0 - drop_p)
    return h2[:, :, :, 1:w + 1]


# ---------------------------------------------------------------------------
# pure-JAX reference (pre-dropout) and self-test
# ---------------------------------------------------------------------------
def _reference_pre_dropout(x, params):
    def block(z, w, b, gm, be):
        y = lax.conv_general_dilated(z, w, (1, 1), ((1, 1), (1, 1)),
                                     dimension_numbers=("NCHW", "OIHW", "NCHW"))
        y = y + b.reshape(1, -1, 1, 1)
        m = y.mean(axis=(0, 2, 3), keepdims=True)
        v = ((y - m) ** 2).mean(axis=(0, 2, 3), keepdims=True)
        y = (y - m) * lax.rsqrt(v + BN_EPS) * gm.reshape(1, -1, 1, 1) + be.reshape(1, -1, 1, 1)
        return jnp.maximum(y, 0.0)

    h = block(x, params["w1"], params["b1"], params["g1"], params["be1"])
    return block(h, params["w2"], params["b2"], params["g2"], params["be2"])


if __name__ == "__main__":
    key = jax.random.PRNGKey(0)
    ks = jax.random.split(key, 9)
    N, Cin, C1, H, W = 2, 4, 8, 16, 16

    x = jax.random.normal(ks[0], (N, Cin, H, W), dtype=jnp.float32)
    params = dict(
        w1=0.2 * jax.random.normal(ks[1], (C1, Cin, 3, 3), jnp.float32),
        b1=0.1 * jax.random.normal(ks[2], (C1,), jnp.float32),       # unused (BN cancels)
        g1=1.0 + 0.1 * jax.random.normal(ks[3], (C1,), jnp.float32),
        be1=0.1 * jax.random.normal(ks[4], (C1,), jnp.float32),
        w2=0.2 * jax.random.normal(ks[5], (C1, C1, 3, 3), jnp.float32),
        b2=0.1 * jax.random.normal(ks[6], (C1,), jnp.float32),       # unused (BN cancels)
        g2=1.0 + 0.1 * jax.random.normal(ks[7], (C1,), jnp.float32),
        be2=0.1 * jax.random.normal(ks[8], (C1,), jnp.float32),
    )

    ref = _reference_pre_dropout(x, params)

    # Deterministic path (dropout disabled): must match the conv+BN+ReLU reference
    # (tolerances account for bf16 MXU operands / bf16 intermediates).
    out_eval = jax.block_until_ready(sub_conv_horizon(x, params, dropout_seed=None))
    assert out_eval.shape == (N, C1, H, W)
    max_err = float(jnp.max(jnp.abs(out_eval - ref)))
    rel_l2 = float(jnp.linalg.norm(out_eval - ref) / (jnp.linalg.norm(ref) + 1e-6))
    assert max_err < 0.2 and rel_l2 < 0.03, f"mismatch vs reference: max={max_err} relL2={rel_l2}"

    # Training path: every nonzero output must be ~ref/(1-p); keep fraction ~0.8.
    out_train = jax.block_until_ready(sub_conv_horizon(x, params, dropout_seed=1234))
    scaled = ref / (1.0 - DROP_P)
    kept_err = jnp.where(out_train != 0.0, jnp.abs(out_train - scaled), 0.0)
    assert float(kept_err.max()) < 0.25, "dropout kept values mismatch"
    strong = ref > 0.05
    kept_frac = float(jnp.sum((out_train != 0.0) & strong) / jnp.maximum(jnp.sum(strong), 1))
    assert 0.6 < kept_frac < 0.95, f"dropout keep fraction implausible: {kept_frac}"

    print("KERNEL_OK")
</pallas_src>

<mosaic_0001>
module attributes {stable_mosaic.version = 11 : i64} {
  func.func @_conv_stats_kernel(%arg0: i32, %arg1: i32, %arg2: memref<1x1x4x326xbf16, #tpu.memory_space<vmem>>, %arg3: memref<9x8x4xbf16, #tpu.memory_space<vmem>>, %arg4: memref<1x288xf32, #tpu.memory_space<vmem>>, %arg5: memref<1x1x8x288xbf16, #tpu.memory_space<vmem>>, %arg6: memref<1x8x2xf32, #tpu.memory_space<vmem>>) attributes {dimension_semantics = [#tpu.dimension_semantics<parallel>, #tpu.dimension_semantics<arbitrary>], iteration_bounds = array<i64: 2, 1>, scalar_prefetch = 0 : i64, scratch_operands = 0 : i64, tpu.core_type = #tpu.core_type<tc>, window_params = [{transform_indices = @transform_0, window_bounds = array<i64: 1, 1, 4, 326>}, {pipeline_mode = #tpu.pipeline_mode<synchronous>, transform_indices = @transform_1, window_bounds = array<i64: 9, 8, 4>}, {pipeline_mode = #tpu.pipeline_mode<synchronous>, transform_indices = @transform_2, window_bounds = array<i64: 1, 288>}, {transform_indices = @transform_3, window_bounds = array<i64: 1, 1, 8, 288>}, {transform_indices = @transform_4, window_bounds = array<i64: 1, 8, 2>}]} {
    %c0 = arith.constant 0 : index
    %c0_0 = arith.constant 0 : index
    %c0_1 = arith.constant 0 : index
    %c0_2 = arith.constant 0 : index
    %0 = vector.load %arg2[%c0, %c0_0, %c0_1, %c0_2] : memref<1x1x4x326xbf16, #tpu.memory_space<vmem>>, vector<1x1x4x288xbf16>
    %1 = vector.shape_cast %0 : vector<1x1x4x288xbf16> to vector<4x288xbf16>
    %c0_3 = arith.constant 0 : index
    %c0_4 = arith.constant 0 : index
    %c0_5 = arith.constant 0 : index
    %2 = vector.load %arg3[%c0_3, %c0_4, %c0_5] : memref<9x8x4xbf16, #tpu.memory_space<vmem>>, vector<1x8x4xbf16>
    %3 = vector.shape_cast %2 : vector<1x8x4xbf16> to vector<8x4xbf16>
    %cst = arith.constant dense<0.000000e+00> : vector<8x288xf32>
    %4 = tpu.matmul %3, %1, %cst {dimension_numbers = #tpu.dot_dimension_numbers<[1], [0], [0], [1], [0, 0, 1, 1], [], []>} : vector<8x4xbf16>, vector<4x288xbf16>, vector<8x288xf32> -> vector<8x288xf32>
    %c0_6 = arith.constant 0 : index
    %c0_7 = arith.constant 0 : index
    %c0_8 = arith.constant 0 : index
    %c1 = arith.constant 1 : index
    %5 = vector.load %arg2[%c0_6, %c0_7, %c0_8, %c1] : memref<1x1x4x326xbf16, #tpu.memory_space<vmem>>, vector<1x1x4x288xbf16>
    %6 = vector.shape_cast %5 : vector<1x1x4x288xbf16> to vector<4x288xbf16>
    %c1_9 = arith.constant 1 : index
    %c0_10 = arith.constant 0 : index
    %c0_11 = arith.constant 0 : index
    %7 = vector.load %arg3[%c1_9, %c0_10, %c0_11] : memref<9x8x4xbf16, #tpu.memory_space<vmem>>, vector<1x8x4xbf16>
    %8 = vector.shape_cast %7 : vector<1x8x4xbf16> to vector<8x4xbf16>
    %cst_12 = arith.constant dense<0.000000e+00> : vector<8x288xf32>
    %9 = tpu.matmul %8, %6, %cst_12 {dimension_numbers = #tpu.dot_dimension_numbers<[1], [0], [0], [1], [0, 0, 1, 1], [], []>} : vector<8x4xbf16>, vector<4x288xbf16>, vector<8x288xf32> -> vector<8x288xf32>
    %10 = arith.addf %4, %9 : vector<8x288xf32>
    %c0_13 = arith.constant 0 : index
    %c0_14 = arith.constant 0 : index
    %c0_15 = arith.constant 0 : index
    %c2 = arith.constant 2 : index
    %11 = vector.load %arg2[%c0_13, %c0_14, %c0_15, %c2] : memref<1x1x4x326xbf16, #tpu.memory_space<vmem>>, vector<1x1x4x288xbf16>
    %12 = vector.shape_cast %11 : vector<1x1x4x288xbf16> to vector<4x288xbf16>
    %c2_16 = arith.constant 2 : index
    %c0_17 = arith.constant 0 : index
    %c0_18 = arith.constant 0 : index
    %13 = vector.load %arg3[%c2_16, %c0_17, %c0_18] : memref<9x8x4xbf16, #tpu.memory_space<vmem>>, vector<1x8x4xbf16>
    %14 = vector.shape_cast %13 : vector<1x8x4xbf16> to vector<8x4xbf16>
    %cst_19 = arith.constant dense<0.000000e+00> : vector<8x288xf32>
    %15 = tpu.matmul %14, %12, %cst_19 {dimension_numbers = #tpu.dot_dimension_numbers<[1], [0], [0], [1], [0, 0, 1, 1], [], []>} : vector<8x4xbf16>, vector<4x288xbf16>, vector<8x288xf32> -> vector<8x288xf32>
    %16 = arith.addf %10, %15 : vector<8x288xf32>
    %c0_20 = arith.constant 0 : index
    %c0_21 = arith.constant 0 : index
    %c0_22 = arith.constant 0 : index
    %c18 = arith.constant 18 : index
    %17 = vector.load %arg2[%c0_20, %c0_21, %c0_22, %c18] : memref<1x1x4x326xbf16, #tpu.memory_space<vmem>>, vector<1x1x4x288xbf16>
    %18 = vector.shape_cast %17 : vector<1x1x4x288xbf16> to vector<4x288xbf16>
    %c3 = arith.constant 3 : index
    %c0_23 = arith.constant 0 : index
    %c0_24 = arith.constant 0 : index
    %19 = vector.load %arg3[%c3, %c0_23, %c0_24] : memref<9x8x4xbf16, #tpu.memory_space<vmem>>, vector<1x8x4xbf16>
    %20 = vector.shape_cast %19 : vector<1x8x4xbf16> to vector<8x4xbf16>
    %cst_25 = arith.constant dense<0.000000e+00> : vector<8x288xf32>
    %21 = tpu.matmul %20, %18, %cst_25 {dimension_numbers = #tpu.dot_dimension_numbers<[1], [0], [0], [1], [0, 0, 1, 1], [], []>} : vector<8x4xbf16>, vector<4x288xbf16>, vector<8x288xf32> -> vector<8x288xf32>
    %22 = arith.addf %16, %21 : vector<8x288xf32>
    %c0_26 = arith.constant 0 : index
    %c0_27 = arith.constant 0 : index
    %c0_28 = arith.constant 0 : index
    %c19 = arith.constant 19 : index
    %23 = vector.load %arg2[%c0_26, %c0_27, %c0_28, %c19] : memref<1x1x4x326xbf16, #tpu.memory_space<vmem>>, vector<1x1x4x288xbf16>
    %24 = vector.shape_cast %23 : vector<1x1x4x288xbf16> to vector<4x288xbf16>
    %c4 = arith.constant 4 : index
    %c0_29 = arith.constant 0 : index
    %c0_30 = arith.constant 0 : index
    %25 = vector.load %arg3[%c4, %c0_29, %c0_30] : memref<9x8x4xbf16, #tpu.memory_space<vmem>>, vector<1x8x4xbf16>
    %26 = vector.shape_cast %25 : vector<1x8x4xbf16> to vector<8x4xbf16>
    %cst_31 = arith.constant dense<0.000000e+00> : vector<8x288xf32>
    %27 = tpu.matmul %26, %24, %cst_31 {dimension_numbers = #tpu.dot_dimension_numbers<[1], [0], [0], [1], [0, 0, 1, 1], [], []>} : vector<8x4xbf16>, vector<4x288xbf16>, vector<8x288xf32> -> vector<8x288xf32>
    %28 = arith.addf %22, %27 : vector<8x288xf32>
    %c0_32 = arith.constant 0 : index
    %c0_33 = arith.constant 0 : index
    %c0_34 = arith.constant 0 : index
    %c20 = arith.constant 20 : index
    %29 = vector.load %arg2[%c0_32, %c0_33, %c0_34, %c20] : memref<1x1x4x326xbf16, #tpu.memory_space<vmem>>, vector<1x1x4x288xbf16>
    %30 = vector.shape_cast %29 : vector<1x1x4x288xbf16> to vector<4x288xbf16>
    %c5 = arith.constant 5 : index
    %c0_35 = arith.constant 0 : index
    %c0_36 = arith.constant 0 : index
    %31 = vector.load %arg3[%c5, %c0_35, %c0_36] : memref<9x8x4xbf16, #tpu.memory_space<vmem>>, vector<1x8x4xbf16>
    %32 = vector.shape_cast %31 : vector<1x8x4xbf16> to vector<8x4xbf16>
    %cst_37 = arith.constant dense<0.000000e+00> : vector<8x288xf32>
    %33 = tpu.matmul %32, %30, %cst_37 {dimension_numbers = #tpu.dot_dimension_numbers<[1], [0], [0], [1], [0, 0, 1, 1], [], []>} : vector<8x4xbf16>, vector<4x288xbf16>, vector<8x288xf32> -> vector<8x288xf32>
    %34 = arith.addf %28, %33 : vector<8x288xf32>
    %c0_38 = arith.constant 0 : index
    %c0_39 = arith.constant 0 : index
    %c0_40 = arith.constant 0 : index
    %c36 = arith.constant 36 : index
    %35 = vector.load %arg2[%c0_38, %c0_39, %c0_40, %c36] : memref<1x1x4x326xbf16, #tpu.memory_space<vmem>>, vector<1x1x4x288xbf16>
    %36 = vector.shape_cast %35 : vector<1x1x4x288xbf16> to vector<4x288xbf16>
    %c6 = arith.constant 6 : index
    %c0_41 = arith.constant 0 : index
    %c0_42 = arith.constant 0 : index
    %37 = vector.load %arg3[%c6, %c0_41, %c0_42] : memref<9x8x4xbf16, #tpu.memory_space<vmem>>, vector<1x8x4xbf16>
    %38 = vector.shape_cast %37 : vector<1x8x4xbf16> to vector<8x4xbf16>
    %cst_43 = arith.constant dense<0.000000e+00> : vector<8x288xf32>
    %39 = tpu.matmul %38, %36, %cst_43 {dimension_numbers = #tpu.dot_dimension_numbers<[1], [0], [0], [1], [0, 0, 1, 1], [], []>} : vector<8x4xbf16>, vector<4x288xbf16>, vector<8x288xf32> -> vector<8x288xf32>
    %40 = arith.addf %34, %39 : vector<8x288xf32>
    %c0_44 = arith.constant 0 : index
    %c0_45 = arith.constant 0 : index
    %c0_46 = arith.constant 0 : index
    %c37 = arith.constant 37 : index
    %41 = vector.load %arg2[%c0_44, %c0_45, %c0_46, %c37] : memref<1x1x4x326xbf16, #tpu.memory_space<vmem>>, vector<1x1x4x288xbf16>
    %42 = vector.shape_cast %41 : vector<1x1x4x288xbf16> to vector<4x288xbf16>
    %c7 = arith.constant 7 : index
    %c0_47 = arith.constant 0 : index
    %c0_48 = arith.constant 0 : index
    %43 = vector.load %arg3[%c7, %c0_47, %c0_48] : memref<9x8x4xbf16, #tpu.memory_space<vmem>>, vector<1x8x4xbf16>
    %44 = vector.shape_cast %43 : vector<1x8x4xbf16> to vector<8x4xbf16>
    %cst_49 = arith.constant dense<0.000000e+00> : vector<8x288xf32>
    %45 = tpu.matmul %44, %42, %cst_49 {dimension_numbers = #tpu.dot_dimension_numbers<[1], [0], [0], [1], [0, 0, 1, 1], [], []>} : vector<8x4xbf16>, vector<4x288xbf16>, vector<8x288xf32> -> vector<8x288xf32>
    %46 = arith.addf %40, %45 : vector<8x288xf32>
    %c0_50 = arith.constant 0 : index
    %c0_51 = arith.constant 0 : index
    %c0_52 = arith.constant 0 : index
    %c38 = arith.constant 38 : index
    %47 = vector.load %arg2[%c0_50, %c0_51, %c0_52, %c38] : memref<1x1x4x326xbf16, #tpu.memory_space<vmem>>, vector<1x1x4x288xbf16>
    %48 = vector.shape_cast %47 : vector<1x1x4x288xbf16> to vector<4x288xbf16>
    %c8 = arith.constant 8 : index
    %c0_53 = arith.constant 0 : index
    %c0_54 = arith.constant 0 : index
    %49 = vector.load %arg3[%c8, %c0_53, %c0_54] : memref<9x8x4xbf16, #tpu.memory_space<vmem>>, vector<1x8x4xbf16>
    %50 = vector.shape_cast %49 : vector<1x8x4xbf16> to vector<8x4xbf16>
    %cst_55 = arith.constant dense<0.000000e+00> : vector<8x288xf32>
    %51 = tpu.matmul %50, %48, %cst_55 {dimension_numbers = #tpu.dot_dimension_numbers<[1], [0], [0], [1], [0, 0, 1, 1], [], []>} : vector<8x4xbf16>, vector<4x288xbf16>, vector<8x288xf32> -> vector<8x288xf32>
    %52 = arith.addf %46, %51 : vector<8x288xf32>
    %c0_56 = arith.constant 0 : index
    %c0_57 = arith.constant 0 : index
    %53 = vector.load %arg4[%c0_56, %c0_57] : memref<1x288xf32, #tpu.memory_space<vmem>>, vector<1x288xf32>
    %54 = vector.broadcast %53 : vector<1x288xf32> to vector<8x288xf32>
    %55 = arith.mulf %52, %54 : vector<8x288xf32>
    %56 = arith.truncf %55 : vector<8x288xf32> to vector<8x288xbf16>
    %c0_58 = arith.constant 0 : index
    %c0_59 = arith.constant 0 : index
    %c0_60 = arith.constant 0 : index
    %c0_61 = arith.constant 0 : index
    %57 = vector.load %arg5[%c0_58, %c0_59, %c0_60, %c0_61] : memref<1x1x8x288xbf16, #tpu.memory_space<vmem>>, vector<1x1x8x288xbf16>
    %58 = vector.shape_cast %57 : vector<1x1x8x288xbf16> to vector<8x288xbf16>
    %59 = vector.shape_cast %56 : vector<8x288xbf16> to vector<1x1x8x288xbf16>
    tpu.vector_store %arg5[%c0_58, %c0_59, %c0_60, %c0_61], %59 {strides = array<i32>} : memref<1x1x8x288xbf16, #tpu.memory_space<vmem>>, vector<1x1x8x288xbf16>,
    %cst_62 = arith.constant dense<0.000000e+00> : vector<8xf32>
    %60 = vector.multi_reduction <add>, %55, %cst_62 [1] : vector<8x288xf32> to vector<8xf32>
    %61 = vector.shape_cast %60 : vector<8xf32> to vector<8x1xf32>
    %62 = arith.mulf %55, %55 : vector<8x288xf32>
    %cst_63 = arith.constant dense<0.000000e+00> : vector<8xf32>
    %63 = vector.multi_reduction <add>, %62, %cst_63 [1] : vector<8x288xf32> to vector<8xf32>
    %64 = vector.shape_cast %63 : vector<8xf32> to vector<8x1xf32>
    %65 = tpu.concatenate %61, %64 in 1 : vector<8x1xf32>, vector<8x1xf32> -> vector<8x2xf32>
    %c0_i32 = arith.constant 0 : i32
    %66 = arith.cmpi eq, %arg1, %c0_i32 : i32
    %67 = arith.extui %66 : i1 to i32
    %c0_i32_64 = arith.constant 0 : i32
    %68 = arith.cmpi ne, %67, %c0_i32_64 : i32
    scf.if %68 {
      %cst_71 = arith.constant 0.000000e+00 : f32
      %75 = vector.broadcast %cst_71 : f32 to vector<8x2xf32>
      %c0_72 = arith.constant 0 : index
      %c0_73 = arith.constant 0 : index
      %c0_74 = arith.constant 0 : index
      %76 = vector.load %arg6[%c0_72, %c0_73, %c0_74] : memref<1x8x2xf32, #tpu.memory_space<vmem>>, vector<1x8x2xf32>
      %77 = vector.shape_cast %76 : vector<1x8x2xf32> to vector<8x2xf32>
      %78 = vector.shape_cast %75 : vector<8x2xf32> to vector<1x8x2xf32>
      tpu.vector_store %arg6[%c0_72, %c0_73, %c0_74], %78 {strides = array<i32>} : memref<1x8x2xf32, #tpu.memory_space<vmem>>, vector<1x8x2xf32>,
    } else {
    }
    %c0_65 = arith.constant 0 : index
    %c0_66 = arith.constant 0 : index
    %c0_67 = arith.constant 0 : index
    %69 = vector.load %arg6[%c0_65, %c0_66, %c0_67] : memref<1x8x2xf32, #tpu.memory_space<vmem>>, vector<1x8x2xf32>
    %70 = vector.shape_cast %69 : vector<1x8x2xf32> to vector<8x2xf32>
    %71 = arith.addf %70, %65 : vector<8x2xf32>
    %c0_68 = arith.constant 0 : index
    %c0_69 = arith.constant 0 : index
    %c0_70 = arith.constant 0 : index
    %72 = vector.load %arg6[%c0_68, %c0_69, %c0_70] : memref<1x8x2xf32, #tpu.memory_space<vmem>>, vector<1x8x2xf32>
    %73 = vector.shape_cast %72 : vector<1x8x2xf32> to vector<8x2xf32>
    %74 = vector.shape_cast %71 : vector<8x2xf32> to vector<1x8x2xf32>
    tpu.vector_store %arg6[%c0_68, %c0_69, %c0_70], %74 {strides = array<i32>} : memref<1x8x2xf32, #tpu.memory_space<vmem>>, vector<1x8x2xf32>,
    return
  }
  func.func @transform_0(%arg0: i32, %arg1: i32) -> (i32, i32, i32, i32) {
    %c0_i32 = arith.constant 0 : i32
    %c0_i32_0 = arith.constant 0 : i32
    %c0_i32_1 = arith.constant 0 : i32
    return %arg0, %arg1, %c0_i32, %c0_i32_0 : i32, i32, i32, i32
  }
  func.func @transform_1(%arg0: i32, %arg1: i32) -> (i32, i32, i32) {
    %c0_i32 = arith.constant 0 : i32
    %c0_i32_0 = arith.constant 0 : i32
    %c0_i32_1 = arith.constant 0 : i32
    %c0_i32_2 = arith.constant 0 : i32
    return %c0_i32, %c0_i32_0, %c0_i32_1 : i32, i32, i32
  }
  func.func @transform_2(%arg0: i32, %arg1: i32) -> (i32, i32) {
    %c0_i32 = arith.constant 0 : i32
    %c0_i32_0 = arith.constant 0 : i32
    %c0_i32_1 = arith.constant 0 : i32
    return %c0_i32, %c0_i32_0 : i32, i32
  }
  func.func @transform_3(%arg0: i32, %arg1: i32) -> (i32, i32, i32, i32) {
    %c0_i32 = arith.constant 0 : i32
    %c0_i32_0 = arith.constant 0 : i32
    %c0_i32_1 = arith.constant 0 : i32
    return %arg0, %arg1, %c0_i32, %c0_i32_0 : i32, i32, i32, i32
  }
  func.func @transform_4(%arg0: i32, %arg1: i32) -> (i32, i32, i32) {
    %c0_i32 = arith.constant 0 : i32
    %c0_i32_0 = arith.constant 0 : i32
    %c0_i32_1 = arith.constant 0 : i32
    return %arg0, %c0_i32, %c0_i32_0 : i32, i32, i32
  }
}

</mosaic_0001>

<llo_original>
// kernel: tpu_custom_call.1
$region0: #{tpu_custom_call.1}
  #allocation0 [shape = 'u32[]', space=smem, size = 0x4, offset = 0x4, fixed_abs, tag = 'smem constant byte address 0x4 - core index']
  #allocation1 [shape = 'u32[144,128]{1,0:T(1,128)}', space=vmem, size = 0x12000, scoped, tag = 'internal scratch']
  %s0 = inlined_call_operand.vmem [shape: bf16[2,1,4,326], index: 0, kind: input, shape index: {}]
  %s1 = inlined_call_operand.vmem [shape: bf16[9,8,4], index: 1, kind: input, shape index: {}]
  %s2 = inlined_call_operand.vmem [shape: f32[1,288], index: 2, kind: input, shape index: {}]
  %s3 = inlined_call_operand.hbm [shape: bf16[2,1,8,288], index: 3, kind: output, shape index: {0}]
  %s4 = inlined_call_operand.vmem [shape: f32[2,8,2], index: 4, kind: output, shape index: {1}]
  %5 = xla_tuple %s3, %s4
  %s6 = sld [smem:[#allocation0]]
  $region57: #{tpu_custom_call.1} parent=0
    _
  %s8 = ssub.s32 1, %s6
  %s9 = scalar_select 0, %s8, %s6
  $region1: #{tpu_custom_call.1} parent=0
    #allocation2 [shape = 'u8[12288]{0}', space=vmem, size = 0x3000, scoped, tag = 'output window, operand 0']
    #allocation3 [shape = 's32[2]{0}', space=sflag, size = 0x8, scoped, tag = 'scoped memory for tpu_custom_call.1']
    %10 = vsyncpa [#allocation3], 0
    %s11 = scalar_lea.sflag [#allocation3], 1
    %12 = vsyncpa %s11, 0
    loop: start=0, step=1, limit=4
    $region2: #{tpu_custom_call.1} parent=1 // loop_pre_header
      _
    $region3: #{tpu_custom_call.1} parent=1 // loop_header
      %s14 = sphi 0, %s18
      %p15 = scmp.ge.s32.totalorder %s14, 4
      %s21 = sphi 0, %s33
      %s22 = sphi 0, %s29
      %s23 = sphi 0, %s21
      %s24 = sphi 0, %s22
      %s25 = sphi 0, %s23
      %s26 = sphi 0, %s24
      %s38 = sphi 0, %s40
      %s41 = sphi 0, %s38
      %s42 = sphi 0, %s41
      %s58 = sphi 0, %s42
      %s62 = sphi 0, %s62
      %s64 = sphi 0, %s62
      %s65 = sphi 0, %s64
      %s79 = sphi 0, %s65
      %s83 = sphi 0, %s83
      %s85 = sphi 0, %s83
      %s86 = sphi 0, %s85
      %s100 = sphi 0, %s86
      %s108 = sphi 0, %s110
      %s111 = sphi 0, %s108
      %s112 = sphi 0, %s111
      %s128 = sphi 0, %s112
      %s134 = sphi 0, %s136
      %s137 = sphi 0, %s134
      %s138 = sphi 0, %s137
      %s154 = sphi 0, %s138
    $region4: #{tpu_custom_call.1} parent=1 // loop_header_branch
      %17 = sbr.rel (%p15) target = $region8
    $region5: #{tpu_custom_call.1} parent=1 // loop_body
      %s19 = ssub.s32 %s14, 1
      %s20 = ssub.s32 %s14, 2
      %s27 = sadd.s32 1, %s22
      %p28 = scmp.ge.s32.totalorder %s27, 1
      %s29 = scalar_select %p28, 0, %s27
      %s30 = sadd.s32 1, %s21
      %s31 = scalar_select %p28, %s30, %s21
      %p32 = scmp.ge.s32.totalorder %s31, 2
      %s33 = scalar_select %p32, 0, %s31
      %s34 = ssub.s32 %s21, %s33
      %s35 = ssub.s32 %s22, %s29
      %s36 = sor.u32 %s34, %s35
      %p37 = scmp.eq.s32.totalorder %s36, 0
      %s39 = sadd.s32 %s38, 1
      %s40 = scalar_select %p37, %s38, %s39
      %p43 = pneg %p37
      %p44 = scmp.eq.s32.totalorder %s14, 1
      %p45 = por %p43, %p44
      %p46 = scmp.ne.s32.totalorder %s38, %s41
      %p47 = scmp.eq.s32.totalorder %s14, 0
      %p48 = por %p46, %p47
      %p49 = scmp.ne.s32.totalorder %s38, %s41
      %p50 = scmp.eq.s32.totalorder %s19, 1
      %p51 = por %p49, %p50
      %p52 = scmp.ne.s32.totalorder %s41, %s42
      %p53 = scmp.eq.s32.totalorder %s19, 0
      %p54 = por %p52, %p53
      %p55 = scmp.ne.s32.totalorder %s41, %s42
      %p56 = scmp.eq.s32.totalorder %s20, 1
      %p57 = por %p55, %p56
      %p59 = scmp.ne.s32.totalorder %s42, %s58
      %p60 = scmp.eq.s32.totalorder %s20, 0
      %p61 = por %p59, %p60
      %s63 = sadd.s32 %s62, 1
      %p66 = scmp.eq.s32.totalorder %s14, 1
      %p67 = scmp.ne.s32.totalorder %s62, %s64
      %p68 = scmp.eq.s32.totalorder %s14, 0
      %p69 = por %p67, %p68
      %p70 = scmp.ne.s32.totalorder %s62, %s64
      %p71 = scmp.eq.s32.totalorder %s19, 1
      %p72 = por %p70, %p71
      %p73 = scmp.ne.s32.totalorder %s64, %s65
      %p74 = scmp.eq.s32.totalorder %s19, 0
      %p75 = por %p73, %p74
      %p76 = scmp.ne.s32.totalorder %s64, %s65
      %p77 = scmp.eq.s32.totalorder %s20, 1
      %p78 = por %p76, %p77
      %p80 = scmp.ne.s32.totalorder %s65, %s79
      %p81 = scmp.eq.s32.totalorder %s20, 0
      %p82 = por %p80, %p81
      %s84 = sadd.s32 %s83, 1
      %p87 = scmp.eq.s32.totalorder %s14, 1
      %p88 = scmp.ne.s32.totalorder %s83, %s85
      %p89 = scmp.eq.s32.totalorder %s14, 0
      %p90 = por %p88, %p89
      %p91 = scmp.ne.s32.totalorder %s83, %s85
      %p92 = scmp.eq.s32.totalorder %s19, 1
      %p93 = por %p91, %p92
      %p94 = scmp.ne.s32.totalorder %s85, %s86
      %p95 = scmp.eq.s32.totalorder %s19, 0
      %p96 = por %p94, %p95
      %p97 = scmp.ne.s32.totalorder %s85, %s86
      %p98 = scmp.eq.s32.totalorder %s20, 1
      %p99 = por %p97, %p98
      %p101 = scmp.ne.s32.totalorder %s86, %s100
      %p102 = scmp.eq.s32.totalorder %s20, 0
      %p103 = por %p101, %p102
      %s104 = ssub.s32 %s21, %s33
      %s105 = ssub.s32 %s22, %s29
      %s106 = sor.u32 %s104, %s105
      %p107 = scmp.eq.s32.totalorder %s106, 0
      %s109 = sadd.s32 %s108, 1
      %s110 = scalar_select %p107, %s108, %s109
      %p113 = pneg %p107
      %p114 = scmp.eq.s32.totalorder %s14, 1
      %p115 = por %p113, %p114
      %p116 = scmp.ne.s32.totalorder %s108, %s111
      %p117 = scmp.eq.s32.totalorder %s14, 0
      %p118 = por %p116, %p117
      %p119 = scmp.ne.s32.totalorder %s108, %s111
      %p120 = scmp.eq.s32.totalorder %s19, 1
      %p121 = por %p119, %p120
      %p122 = scmp.ne.s32.totalorder %s111, %s112
      %p123 = scmp.eq.s32.totalorder %s19, 0
      %p124 = por %p122, %p123
      %p125 = scmp.ne.s32.totalorder %s111, %s112
      %p126 = scmp.eq.s32.totalorder %s20, 1
      %p127 = por %p125, %p126
      %p129 = scmp.ne.s32.totalorder %s112, %s128
      %p130 = scmp.eq.s32.totalorder %s20, 0
      %p131 = por %p129, %p130
      %s132 = ssub.s32 %s21, %s33
      %p133 = scmp.eq.s32.totalorder %s132, 0
      %s135 = sadd.s32 %s134, 1
      %s136 = scalar_select %p133, %s134, %s135
      %p139 = pneg %p133
      %p140 = scmp.eq.s32.totalorder %s14, 1
      %p141 = por %p139, %p140
      %p142 = scmp.ne.s32.totalorder %s134, %s137
      %p143 = scmp.eq.s32.totalorder %s14, 0
      %p144 = por %p142, %p143
      %p145 = scmp.ne.s32.totalorder %s134, %s137
      %p146 = scmp.eq.s32.totalorder %s19, 1
      %p147 = por %p145, %p146
      %p148 = scmp.ne.s32.totalorder %s137, %s138
      %p149 = scmp.eq.s32.totalorder %s19, 0
      %p150 = por %p148, %p149
      %p151 = scmp.ne.s32.totalorder %s137, %s138
      %p152 = scmp.eq.s32.totalorder %s20, 1
      %p153 = por %p151, %p152
      %p155 = scmp.ne.s32.totalorder %s138, %s154
      %p156 = scmp.eq.s32.totalorder %s20, 0
      %p157 = por %p155, %p156
      %p158 = scmp.le.s32.totalorder 1, %s14
      %p159 = scmp.lt.s32.totalorder %s14, 3
      %p160 = pnand %p158, %p159
      %p161 = pneg %p160
      // Predicated region
      $region9: #{tpu_custom_call.1} parent=5 // pred_check
        _
      $region10: #{tpu_custom_call.1} parent=5 // pred_check_branch
        %163 = sbr.rel (%p160) target = $region12
      $region11: #{tpu_custom_call.1} parent=5 // pred_region
        %s164 = ssub.s32 %s14, 1
        // Predicated region
        $region13: #{tpu_custom_call.1} parent=11 // pred_check
          %p165 = pneg %p75
        $region14: #{tpu_custom_call.1} parent=11 // pred_check_branch
          %167 = sbr.rel (%p165) target = $region16
        $region15: #{tpu_custom_call.1} parent=11 // pred_region
          _
        $region16: #{tpu_custom_call.1} parent=11 // pred_fallthru
          _
        // Predicated region
        $region17: #{tpu_custom_call.1} parent=11 // pred_check
          %p168 = pneg %p96
        $region18: #{tpu_custom_call.1} parent=11 // pred_check_branch
          %170 = sbr.rel (%p168) target = $region20
        $region19: #{tpu_custom_call.1} parent=11 // pred_region
          _
        $region20: #{tpu_custom_call.1} parent=11 // pred_fallthru
          _
      $region12: #{tpu_custom_call.1} parent=5 // pred_fallthru
        _
      %p171 = scmp.lt.s32.totalorder %s14, 2
      // Predicated region
      $region21: #{tpu_custom_call.1} parent=5 // pred_check
        %p172 = pneg %p171
      $region22: #{tpu_custom_call.1} parent=5 // pred_check_branch
        %174 = sbr.rel (%p172) target = $region24
      $region23: #{tpu_custom_call.1} parent=5 // pred_region
        // Predicated region
        $region25: #{tpu_custom_call.1} parent=23 // pred_check
          %p175 = pneg %p48
        $region26: #{tpu_custom_call.1} parent=23 // pred_check_branch
          %177 = sbr.rel (%p175) target = $region28
        $region27: #{tpu_custom_call.1} parent=23 // pred_region
          %p178 = scmp.lt.s32.totalorder %s21, 1
          %s179 = scalar_select %p178, %s21, 1
          %p180 = scmp.lt.s32.totalorder %s22, 0
          %s181 = scalar_select %p180, %s22, 0
          %s182 = smul.addr %s181, 3
          %s183 = smul.addr %s179, 3
          %s184 = sadd.s32 %s182, %s183
          %s185 = smul.addr %s184, 2
          %s186 = scalar_lea.vmem %s0, %s185
        $region28: #{tpu_custom_call.1} parent=23 // pred_fallthru
          _
      $region24: #{tpu_custom_call.1} parent=5 // pred_fallthru
        _
      %p187 = scmp.le.s32.totalorder 1, %s14
      %p188 = scmp.lt.s32.totalorder %s14, 3
      %p189 = pnand %p187, %p188
      %p190 = pneg %p189
      // Predicated region
      $region29: #{tpu_custom_call.1} parent=5 // pred_check
        _
      $region30: #{tpu_custom_call.1} parent=5 // pred_check_branch
        %192 = sbr.rel (%p189) target = $region32
      $region31: #{tpu_custom_call.1} parent=5 // pred_region
        %s193 = ssub.s32 %s14, 1
        %p194 = scmp.lt.s32.totalorder %s23, 1
        %s195 = scalar_select %p194, %s23, 1
        %p196 = scmp.lt.s32.totalorder %s24, 0
        %s197 = scalar_select %p196, %s24, 0
        %s198 = smul.addr %s197, 3
        %s199 = smul.addr %s195, 3
        %s200 = sadd.s32 %s198, %s199
        %s201 = smul.addr %s200, 2
        %s202 = scalar_lea.vmem %s0, %s201
        %p203 = pneg %p54
        %p204 = pneg %p51
        %p205 = pneg %p75
        %p206 = pneg %p72
        %p207 = pneg %p96
        %p208 = pneg %p93
        %p209 = pneg %p124
        %p210 = pneg %p121
        %s211 = sand.u32 %s111, 1
        %s212 = scalar_lea.sflag [#allocation3], %s211
        %s213 = sand.u32 %s111, 1
        %s214 = smul.addr %s213, 12
        %s215 = scalar_lea.vmem [#allocation2], %s214
        %p216 = pneg %p150
        %p217 = pneg %p147
        %p218 = scmp.lt.s32.totalorder %s23, 1
        %s219 = scalar_select %p218, %s23, 1
        %s220 = smul.addr %s219, 8
        %s221 = scalar_lea.vmem %s4, %s220
        %p222 = scmp.lt.s32.totalorder %s23, 1
        %s223 = scalar_select %p222, %s23, 1
        %p224 = scmp.lt.s32.totalorder %s24, 0
        %s225 = scalar_select %p224, %s24, 0
        %s226 = smul.addr %s225, 3
        %s227 = smul.addr %s223, 3
        %s228 = sadd.s32 %s226, %s227
        %s229 = smul.addr %s228, 2
        %s230 = scalar_lea.vmem %s0, %s229
        %p231 = scmp.lt.s32.totalorder %s23, 1
        %s232 = scalar_select %p231, %s23, 1
        %s233 = smul.addr %s232, 8
        %s234 = scalar_lea.vmem %s4, %s233
        %v236 = vld [vmem:[%s230] sm:$0x3f]
        %v237 = vld [vmem:[%s1] sm:$0xf]
        %s238 = scalar_lea.vmem %s1, 4
        %v239 = vld [vmem:[%s238] sm:$0xf]
        %v241 = vcombine.high %v236, %v236
        %v243 = vunpack.c.l.s4 1983009808
        %v244 = vunpack.c.0.s8 %v243
        %v245 = vlaneseq
        %v246 = vshrl.u32 %v245, 7
        %v247 = vsub.s32 %v244, %v246
        %v248 = vrot.slane %v236, %v247
        %v250 = vunpack.c.l.s4 1983009808
        %v251 = vunpack.c.0.s8 %v250
        %v252 = vlaneseq
        %v253 = vshrl.u32 %v252, 7
        %v254 = vsub.s32 %v251, %v253
        %v255 = vrot.slane %v241, %v254
        %v256 = vcombine.high %v248, %v248
        %257 = vrot.lane.b32.xlu0 %v248, 127
        %v258 = vpop.permute.xlu0 %257
        %259 = vrot.lane.b32.xlu0 %v256, 127
        %v260 = vpop.permute.xlu0 %259
        %261 = vrot.lane.b32.xlu0 %v255, 127
        %v262 = vpop.permute.xlu0 %261
        %vm263 = vcmask 1039360
        %v264 = vsel %vm263, %v258, %v260
        %v265 = vsel %vm263, %v260, %v262
        %vm266 = vcmask 31744
        %v268 = vsel %vm266, %v239, 0
        %vm270 = vcmask 1041408
        %v272 = vsel %vm270, %v264, 0
        %v275 = vsel %vm270, %v265, 0
        %v278 = vsel %vm270, %v262, 0
        %280 = vmatprep.subr.bf16.mxu0 0
        %281 = vmatpush1.bf16.msra.mxu0 0
        %282 = vmatprep.subr.bf16.mxu0 0
        %283 = vmatpush1.bf16.msra.mxu0 0
        %284 = vmatprep.subr.bf16.mxu0 0
        %285 = vmatpush1.bf16.msra.mxu0 0
        %286 = vmatprep.subr.bf16.mxu0 0
        %287 = vmatpush1.bf16.msra.mxu0 0
        %288 = vmatprep.subr.bf16.mxu0 0
        %289 = vmatpush1.bf16.msra.mxu0 0
        %290 = vmatprep.subr.bf16.mxu0 0
        %291 = vmatpush1.bf16.msra.mxu0 0
        %292 = vmatprep.subr.bf16.mxu0 0
        %293 = vmatpush1.bf16.msra.mxu0 0
        %294 = vmatprep.subr.bf16.mxu0 %v275
        %295 = vmatpush1.bf16.msra.mxu0 %v272
        %296 = vmatprep.subr.bf16.mxu0 0
        %297 = vmatpush2.bf16.msra.mxu0 0
        %298 = vmatprep.subr.bf16.mxu0 0
        %299 = vmatpush2.bf16.msra.mxu0 0
        %300 = vmatprep.subr.bf16.mxu0 0
        %301 = vmatpush2.bf16.msra.mxu0 0
        %302 = vmatprep.subr.bf16.mxu0 0
        %303 = vmatpush2.bf16.msra.mxu0 0
        %304 = vmatprep.subr.bf16.mxu0 0
        %305 = vmatpush2.bf16.msra.mxu0 0
        %306 = vmatprep.subr.bf16.mxu0 0
        %307 = vmatpush2.bf16.msra.mxu0 0
        %308 = vmatprep.subr.bf16.mxu0 0
        %309 = vmatpush2.bf16.msra.mxu0 0
        %310 = vmatprep.subr.bf16.mxu0 0
        %311 = vmatpush2.bf16.msra.mxu0 0
        %312 = vmatprep.mubr.bf16.mxu0 0
        %313 = vmatmul.mubr.bf16.gmra.mxu0 %v268
        %v314 = vpop.f32.mrf.mxu0
        %v315 = vadd.f32 0.0, %v314
        %v316 = vpop.f32.mrf.mxu0
        %v317 = vadd.f32 0.0, %v316
        %v318 = vpop.f32.mrf.mxu0
        %v319 = vpop.f32.mrf.mxu0
        %320 = vdwg.mxu0
        %321 = vmatprep.subr.bf16.mxu0 0
        %322 = vmatpush1.bf16.msra.mxu0 0
        %323 = vmatprep.subr.bf16.mxu0 0
        %324 = vmatpush1.bf16.msra.mxu0 0
        %325 = vmatprep.subr.bf16.mxu0 0
        %326 = vmatpush1.bf16.msra.mxu0 0
        %327 = vmatprep.subr.bf16.mxu0 0
        %328 = vmatpush1.bf16.msra.mxu0 0
        %329 = vmatprep.subr.bf16.mxu0 0
        %330 = vmatpush1.bf16.msra.mxu0 0
        %331 = vmatprep.subr.bf16.mxu0 0
        %332 = vmatpush1.bf16.msra.mxu0 0
        %333 = vmatprep.subr.bf16.mxu0 0
        %334 = vmatpush1.bf16.msra.mxu0 0
        %335 = vmatprep.subr.bf16.mxu0 0
        %336 = vmatpush1.bf16.msra.mxu0 %v278
        %337 = vmatprep.subr.bf16.mxu0 0
        %338 = vmatpush2.bf16.msra.mxu0 0
        %339 = vmatprep.subr.bf16.mxu0 0
        %340 = vmatpush2.bf16.msra.mxu0 0
        %341 = vmatprep.subr.bf16.mxu0 0
        %342 = vmatpush2.bf16.msra.mxu0 0
        %343 = vmatprep.subr.bf16.mxu0 0
        %344 = vmatpush2.bf16.msra.mxu0 0
        %345 = vmatprep.subr.bf16.mxu0 0
        %346 = vmatpush2.bf16.msra.mxu0 0
        %347 = vmatprep.subr.bf16.mxu0 0
        %348 = vmatpush2.bf16.msra.mxu0 0
        %349 = vmatprep.subr.bf16.mxu0 0
        %350 = vmatpush2.bf16.msra.mxu0 0
        %351 = vmatprep.subr.bf16.mxu0 0
        %352 = vmatpush2.bf16.msra.mxu0 0
        %353 = vmatprep.mubr.bf16.mxu0 0
        %354 = vmatmul.mubr.bf16.gmra.mxu0 %v268
        %v355 = vpop.f32.mrf.mxu0
        %v356 = vadd.f32 0.0, %v355
        %v357 = vpop.f32.mrf.mxu0
        %v358 = vpop.f32.mrf.mxu0
        %v359 = vpop.f32.mrf.mxu0
        %360 = vdwg.mxu0
        %v362 = vsel %vm266, %v237, 0
        %v365 = vsel %vm270, %v248, 0
        %v368 = vsel %vm270, %v256, 0
        %v371 = vsel %vm270, %v255, 0
        %373 = vmatprep.subr.bf16.mxu0 0
        %374 = vmatpush1.bf16.msra.mxu0 0
        %375 = vmatprep.subr.bf16.mxu0 0
        %376 = vmatpush1.bf16.msra.mxu0 0
        %377 = vmatprep.subr.bf16.mxu0 0
        %378 = vmatpush1.bf16.msra.mxu0 0
        %379 = vmatprep.subr.bf16.mxu0 0
        %380 = vmatpush1.bf16.msra.mxu0 0
        %381 = vmatprep.subr.bf16.mxu0 0
        %382 = vmatpush1.bf16.msra.mxu0 0
        %383 = vmatprep.subr.bf16.mxu0 0
        %384 = vmatpush1.bf16.msra.mxu0 0
        %385 = vmatprep.subr.bf16.mxu0 0
        %386 = vmatpush1.bf16.msra.mxu0 0
        %387 = vmatprep.subr.bf16.mxu0 %v368
        %388 = vmatpush1.bf16.msra.mxu0 %v365
        %389 = vmatprep.subr.bf16.mxu0 0
        %390 = vmatpush2.bf16.msra.mxu0 0
        %391 = vmatprep.subr.bf16.mxu0 0
        %392 = vmatpush2.bf16.msra.mxu0 0
        %393 = vmatprep.subr.bf16.mxu0 0
        %394 = vmatpush2.bf16.msra.mxu0 0
        %395 = vmatprep.subr.bf16.mxu0 0
        %396 = vmatpush2.bf16.msra.mxu0 0
        %397 = vmatprep.subr.bf16.mxu0 0
        %398 = vmatpush2.bf16.msra.mxu0 0
        %399 = vmatprep.subr.bf16.mxu0 0
        %400 = vmatpush2.bf16.msra.mxu0 0
        %401 = vmatprep.subr.bf16.mxu0 0
        %402 = vmatpush2.bf16.msra.mxu0 0
        %403 = vmatprep.subr.bf16.mxu0 0
        %404 = vmatpush2.bf16.msra.mxu0 0
        %405 = vmatprep.mubr.bf16.mxu0 0
        %406 = vmatmul.mubr.bf16.gmra.mxu0 %v362
        %v407 = vpop.f32.mrf.mxu0
        %v408 = vadd.f32 %v315, %v407
        %v409 = vpop.f32.mrf.mxu0
        %v410 = vadd.f32 %v317, %v409
        %v411 = vpop.f32.mrf.mxu0
        %v412 = vpop.f32.mrf.mxu0
        %413 = vdwg.mxu0
        %414 = vmatprep.subr.bf16.mxu0 0
        %415 = vmatpush1.bf16.msra.mxu0 0
        %416 = vmatprep.subr.bf16.mxu0 0
        %417 = vmatpush1.bf16.msra.mxu0 0
        %418 = vmatprep.subr.bf16.mxu0 0
        %419 = vmatpush1.bf16.msra.mxu0 0
        %420 = vmatprep.subr.bf16.mxu0 0
        %421 = vmatpush1.bf16.msra.mxu0 0
        %422 = vmatprep.subr.bf16.mxu0 0
        %423 = vmatpush1.bf16.msra.mxu0 0
        %424 = vmatprep.subr.bf16.mxu0 0
        %425 = vmatpush1.bf16.msra.mxu0 0
        %426 = vmatprep.subr.bf16.mxu0 0
        %427 = vmatpush1.bf16.msra.mxu0 0
        %428 = vmatprep.subr.bf16.mxu0 0
        %429 = vmatpush1.bf16.msra.mxu0 %v371
        %430 = vmatprep.subr.bf16.mxu0 0
        %431 = vmatpush2.bf16.msra.mxu0 0
        %432 = vmatprep.subr.bf16.mxu0 0
        %433 = vmatpush2.bf16.msra.mxu0 0
        %434 = vmatprep.subr.bf16.mxu0 0
        %435 = vmatpush2.bf16.msra.mxu0 0
        %436 = vmatprep.subr.bf16.mxu0 0
        %437 = vmatpush2.bf16.msra.mxu0 0
        %438 = vmatprep.subr.bf16.mxu0 0
        %439 = vmatpush2.bf16.msra.mxu0 0
        %440 = vmatprep.subr.bf16.mxu0 0
        %441 = vmatpush2.bf16.msra.mxu0 0
        %442 = vmatprep.subr.bf16.mxu0 0
        %443 = vmatpush2.bf16.msra.mxu0 0
        %444 = vmatprep.subr.bf16.mxu0 0
        %445 = vmatpush2.bf16.msra.mxu0 0
        %446 = vmatprep.mubr.bf16.mxu0 0
        %447 = vmatmul.mubr.bf16.gmra.mxu0 %v362
        %v448 = vpop.f32.mrf.mxu0
        %v449 = vadd.f32 %v356, %v448
        %v450 = vpop.f32.mrf.mxu0
        %v451 = vpop.f32.mrf.mxu0
        %v452 = vpop.f32.mrf.mxu0
        %453 = vdwg.mxu0
        %v454 = vld [vmem:[%s230] sm:$0x3f]
        %s455 = scalar_lea.vmem %s1, 8
        %v456 = vld [vmem:[%s455] sm:$0xf]
        %v458 = vcombine.high %v454, %v454
        %v460 = vunpack.c.l.s4 1983009808
        %v461 = vunpack.c.0.s8 %v460
        %v462 = vlaneseq
        %v463 = vshrl.u32 %v462, 7
        %v464 = vsub.s32 %v461, %v463
        %v465 = vrot.slane %v454, %v464
        %v467 = vunpack.c.l.s4 1983009808
        %v468 = vunpack.c.0.s8 %v467
        %v469 = vlaneseq
        %v470 = vshrl.u32 %v469, 7
        %v471 = vsub.s32 %v468, %v470
        %v472 = vrot.slane %v458, %v471
        %v473 = vcombine.high %v465, %v465
        %474 = vrot.lane.b32.xlu0 %v465, 126
        %v475 = vpop.permute.xlu0 %474
        %476 = vrot.lane.b32.xlu0 %v473, 126
        %v477 = vpop.permute.xlu0 %476
        %478 = vrot.lane.b32.xlu0 %v472, 126
        %v479 = vpop.permute.xlu0 %478
        %vm480 = vcmask 1031168
        %v481 = vsel %vm480, %v475, %v477
        %v482 = vsel %vm480, %v477, %v479
        %v484 = vsel %vm266, %v456, 0
        %v487 = vsel %vm270, %v481, 0
        %v490 = vsel %vm270, %v482, 0
        %v493 = vsel %vm270, %v479, 0
        %495 = vmatprep.subr.bf16.mxu0 0
        %496 = vmatpush1.bf16.msra.mxu0 0
        %497 = vmatprep.subr.bf16.mxu0 0
        %498 = vmatpush1.bf16.msra.mxu0 0
        %499 = vmatprep.subr.bf16.mxu0 0
        %500 = vmatpush1.bf16.msra.mxu0 0
        %501 = vmatprep.subr.bf16.mxu0 0
        %502 = vmatpush1.bf16.msra.mxu0 0
        %503 = vmatprep.subr.bf16.mxu0 0
        %504 = vmatpush1.bf16.msra.mxu0 0
        %505 = vmatprep.subr.bf16.mxu0 0
        %506 = vmatpush1.bf16.msra.mxu0 0
        %507 = vmatprep.subr.bf16.mxu0 0
        %508 = vmatpush1.bf16.msra.mxu0 0
        %509 = vmatprep.subr.bf16.mxu0 %v490
        %510 = vmatpush1.bf16.msra.mxu0 %v487
        %511 = vmatprep.subr.bf16.mxu0 0
        %512 = vmatpush2.bf16.msra.mxu0 0
        %513 = vmatprep.subr.bf16.mxu0 0
        %514 = vmatpush2.bf16.msra.mxu0 0
        %515 = vmatprep.subr.bf16.mxu0 0
        %516 = vmatpush2.bf16.msra.mxu0 0
        %517 = vmatprep.subr.bf16.mxu0 0
        %518 = vmatpush2.bf16.msra.mxu0 0
        %519 = vmatprep.subr.bf16.mxu0 0
        %520 = vmatpush2.bf16.msra.mxu0 0
        %521 = vmatprep.subr.bf16.mxu0 0
        %522 = vmatpush2.bf16.msra.mxu0 0
        %523 = vmatprep.subr.bf16.mxu0 0
        %524 = vmatpush2.bf16.msra.mxu0 0
        %525 = vmatprep.subr.bf16.mxu0 0
        %526 = vmatpush2.bf16.msra.mxu0 0
        %527 = vmatprep.mubr.bf16.mxu0 0
        %528 = vmatmul.mubr.bf16.gmra.mxu0 %v484
        %v529 = vpop.f32.mrf.mxu0
        %v530 = vadd.f32 0.0, %v529
        %v531 = vpop.f32.mrf.mxu0
        %v532 = vadd.f32 0.0, %v531
        %v533 = vpop.f32.mrf.mxu0
        %v534 = vpop.f32.mrf.mxu0
        %535 = vdwg.mxu0
        %536 = vmatprep.subr.bf16.mxu0 0
        %537 = vmatpush1.bf16.msra.mxu0 0
        %538 = vmatprep.subr.bf16.mxu0 0
        %539 = vmatpush1.bf16.msra.mxu0 0
        %540 = vmatprep.subr.bf16.mxu0 0
        %541 = vmatpush1.bf16.msra.mxu0 0
        %542 = vmatprep.subr.bf16.mxu0 0
        %543 = vmatpush1.bf16.msra.mxu0 0
        %544 = vmatprep.subr.bf16.mxu0 0
        %545 = vmatpush1.bf16.msra.mxu0 0
        %546 = vmatprep.subr.bf16.mxu0 0
        %547 = vmatpush1.bf16.msra.mxu0 0
        %548 = vmatprep.subr.bf16.mxu0 0
        %549 = vmatpush1.bf16.msra.mxu0 0
        %550 = vmatprep.subr.bf16.mxu0 0
        %551 = vmatpush1.bf16.msra.mxu0 %v493
        %552 = vmatprep.subr.bf16.mxu0 0
        %553 = vmatpush2.bf16.msra.mxu0 0
        %554 = vmatprep.subr.bf16.mxu0 0
        %555 = vmatpush2.bf16.msra.mxu0 0
        %556 = vmatprep.subr.bf16.mxu0 0
        %557 = vmatpush2.bf16.msra.mxu0 0
        %558 = vmatprep.subr.bf16.mxu0 0
        %559 = vmatpush2.bf16.msra.mxu0 0
        %560 = vmatprep.subr.bf16.mxu0 0
        %561 = vmatpush2.bf16.msra.mxu0 0
        %562 = vmatprep.subr.bf16.mxu0 0
        %563 = vmatpush2.bf16.msra.mxu0 0
        %564 = vmatprep.subr.bf16.mxu0 0
        %565 = vmatpush2.bf16.msra.mxu0 0
        %566 = vmatprep.subr.bf16.mxu0 0
        %567 = vmatpush2.bf16.msra.mxu0 0
        %568 = vmatprep.mubr.bf16.mxu0 0
        %569 = vmatmul.mubr.bf16.gmra.mxu0 %v484
        %v570 = vpop.f32.mrf.mxu0
        %v571 = vadd.f32 0.0, %v570
        %v572 = vpop.f32.mrf.mxu0
        %v573 = vpop.f32.mrf.mxu0
        %v574 = vpop.f32.mrf.mxu0
        %575 = vdwg.mxu0
        %v576 = vadd.f32 %v408, %v530
        %v577 = vadd.f32 %v410, %v532
        %v578 = vadd.f32 %v449, %v571
        %v579 = vld [vmem:[%s230] sm:$0x3f]
        %s580 = scalar_lea.vmem %s1, 12
        %v581 = vld [vmem:[%s580] sm:$0xf]
        %v583 = vcombine.high %v579, %v579
        %v585 = vunpack.c.l.s4 1983009808
        %v586 = vunpack.c.0.s8 %v585
        %v587 = vlaneseq
        %v588 = vshrl.u32 %v587, 7
        %v589 = vsub.s32 %v586, %v588
        %v590 = vrot.slane %v579, %v589
        %v592 = vunpack.c.l.s4 1983009808
        %v593 = vunpack.c.0.s8 %v592
        %v594 = vlaneseq
        %v595 = vshrl.u32 %v594, 7
        %v596 = vsub.s32 %v593, %v595
        %v597 = vrot.slane %v583, %v596
        %v598 = vcombine.high %v590, %v590
        %599 = vrot.lane.b32.xlu0 %v590, 110
        %v600 = vpop.permute.xlu0 %599
        %601 = vrot.lane.b32.xlu0 %v598, 110
        %v602 = vpop.permute.xlu0 %601
        %603 = vrot.lane.b32.xlu0 %v597, 110
        %v604 = vpop.permute.xlu0 %603
        %vm605 = vcmask 900096
        %v606 = vsel %vm605, %v600, %v602
        %v607 = vsel %vm605, %v602, %v604
        %v609 = vsel %vm266, %v581, 0
        %v612 = vsel %vm270, %v606, 0
        %v615 = vsel %vm270, %v607, 0
        %v618 = vsel %vm270, %v604, 0
        %620 = vmatprep.subr.bf16.mxu0 0
        %621 = vmatpush1.bf16.msra.mxu0 0
        %622 = vmatprep.subr.bf16.mxu0 0
        %623 = vmatpush1.bf16.msra.mxu0 0
        %624 = vmatprep.subr.bf16.mxu0 0
        %625 = vmatpush1.bf16.msra.mxu0 0
        %626 = vmatprep.subr.bf16.mxu0 0
        %627 = vmatpush1.bf16.msra.mxu0 0
        %628 = vmatprep.subr.bf16.mxu0 0
        %629 = vmatpush1.bf16.msra.mxu0 0
        %630 = vmatprep.subr.bf16.mxu0 0
        %631 = vmatpush1.bf16.msra.mxu0 0
        %632 = vmatprep.subr.bf16.mxu0 0
        %633 = vmatpush1.bf16.msra.mxu0 0
        %634 = vmatprep.subr.bf16.mxu0 %v615
        %635 = vmatpush1.bf16.msra.mxu0 %v612
        %636 = vmatprep.subr.bf16.mxu0 0
        %637 = vmatpush2.bf16.msra.mxu0 0
        %638 = vmatprep.subr.bf16.mxu0 0
        %639 = vmatpush2.bf16.msra.mxu0 0
        %640 = vmatprep.subr.bf16.mxu0 0
        %641 = vmatpush2.bf16.msra.mxu0 0
        %642 = vmatprep.subr.bf16.mxu0 0
        %643 = vmatpush2.bf16.msra.mxu0 0
        %644 = vmatprep.subr.bf16.mxu0 0
        %645 = vmatpush2.bf16.msra.mxu0 0
        %646 = vmatprep.subr.bf16.mxu0 0
        %647 = vmatpush2.bf16.msra.mxu0 0
        %648 = vmatprep.subr.bf16.mxu0 0
        %649 = vmatpush2.bf16.msra.mxu0 0
        %650 = vmatprep.subr.bf16.mxu0 0
        %651 = vmatpush2.bf16.msra.mxu0 0
        %652 = vmatprep.mubr.bf16.mxu0 0
        %653 = vmatmul.mubr.bf16.gmra.mxu0 %v609
        %v654 = vpop.f32.mrf.mxu0
        %v655 = vadd.f32 0.0, %v654
        %v656 = vpop.f32.mrf.mxu0
        %v657 = vadd.f32 0.0, %v656
        %v658 = vpop.f32.mrf.mxu0
        %v659 = vpop.f32.mrf.mxu0
        %660 = vdwg.mxu0
        %661 = vmatprep.subr.bf16.mxu0 0
        %662 = vmatpush1.bf16.msra.mxu0 0
        %663 = vmatprep.subr.bf16.mxu0 0
        %664 = vmatpush1.bf16.msra.mxu0 0
        %665 = vmatprep.subr.bf16.mxu0 0
        %666 = vmatpush1.bf16.msra.mxu0 0
        %667 = vmatprep.subr.bf16.mxu0 0
        %668 = vmatpush1.bf16.msra.mxu0 0
        %669 = vmatprep.subr.bf16.mxu0 0
        %670 = vmatpush1.bf16.msra.mxu0 0
        %671 = vmatprep.subr.bf16.mxu0 0
        %672 = vmatpush1.bf16.msra.mxu0 0
        %673 = vmatprep.subr.bf16.mxu0 0
        %674 = vmatpush1.bf16.msra.mxu0 0
        %675 = vmatprep.subr.bf16.mxu0 0
        %676 = vmatpush1.bf16.msra.mxu0 %v618
        %677 = vmatprep.subr.bf16.mxu0 0
        %678 = vmatpush2.bf16.msra.mxu0 0
        %679 = vmatprep.subr.bf16.mxu0 0
        %680 = vmatpush2.bf16.msra.mxu0 0
        %681 = vmatprep.subr.bf16.mxu0 0
        %682 = vmatpush2.bf16.msra.mxu0 0
        %683 = vmatprep.subr.bf16.mxu0 0
        %684 = vmatpush2.bf16.msra.mxu0 0
        %685 = vmatprep.subr.bf16.mxu0 0
        %686 = vmatpush2.bf16.msra.mxu0 0
        %687 = vmatprep.subr.bf16.mxu0 0
        %688 = vmatpush2.bf16.msra.mxu0 0
        %689 = vmatprep.subr.bf16.mxu0 0
        %690 = vmatpush2.bf16.msra.mxu0 0
        %691 = vmatprep.subr.bf16.mxu0 0
        %692 = vmatpush2.bf16.msra.mxu0 0
        %693 = vmatprep.mubr.bf16.mxu0 0
        %694 = vmatmul.mubr.bf16.gmra.mxu0 %v609
        %v695 = vpop.f32.mrf.mxu0
        %v696 = vadd.f32 0.0, %v695
        %v697 = vpop.f32.mrf.mxu0
        %v698 = vpop.f32.mrf.mxu0
        %v699 = vpop.f32.mrf.mxu0
        %700 = vdwg.mxu0
        %v701 = vadd.f32 %v576, %v655
        %v702 = vadd.f32 %v577, %v657
        %v703 = vadd.f32 %v578, %v696
        %v704 = vld [vmem:[%s230] sm:$0x3f]
        %s705 = scalar_lea.vmem %s1, 16
        %v706 = vld [vmem:[%s705] sm:$0xf]
        %v708 = vcombine.high %v704, %v704
        %v710 = vunpack.c.l.s4 1983009808
        %v711 = vunpack.c.0.s8 %v710
        %v712 = vlaneseq
        %v713 = vshrl.u32 %v712, 7
        %v714 = vsub.s32 %v711, %v713
        %v715 = vrot.slane %v704, %v714
        %v717 = vunpack.c.l.s4 1983009808
        %v718 = vunpack.c.0.s8 %v717
        %v719 = vlaneseq
        %v720 = vshrl.u32 %v719, 7
        %v721 = vsub.s32 %v718, %v720
        %v722 = vrot.slane %v708, %v721
        %v723 = vcombine.high %v715, %v715
        %724 = vrot.lane.b32.xlu0 %v715, 109
        %v725 = vpop.permute.xlu0 %724
        %726 = vrot.lane.b32.xlu0 %v723, 109
        %v727 = vpop.permute.xlu0 %726
        %728 = vrot.lane.b32.xlu0 %v722, 109
        %v729 = vpop.permute.xlu0 %728
        %vm730 = vcmask 891904
        %v731 = vsel %vm730, %v725, %v727
        %v732 = vsel %vm730, %v727, %v729
        %v734 = vsel %vm266, %v706, 0
        %v737 = vsel %vm270, %v731, 0
        %v740 = vsel %vm270, %v732, 0
        %v743 = vsel %vm270, %v729, 0
        %745 = vmatprep.subr.bf16.mxu0 0
        %746 = vmatpush1.bf16.msra.mxu0 0
        %747 = vmatprep.subr.bf16.mxu0 0
        %748 = vmatpush1.bf16.msra.mxu0 0
        %749 = vmatprep.subr.bf16.mxu0 0
        %750 = vmatpush1.bf16.msra.mxu0 0
        %751 = vmatprep.subr.bf16.mxu0 0
        %752 = vmatpush1.bf16.msra.mxu0 0
        %753 = vmatprep.subr.bf16.mxu0 0
        %754 = vmatpush1.bf16.msra.mxu0 0
        %755 = vmatprep.subr.bf16.mxu0 0
        %756 = vmatpush1.bf16.msra.mxu0 0
        %757 = vmatprep.subr.bf16.mxu0 0
        %758 = vmatpush1.bf16.msra.mxu0 0
        %759 = vmatprep.subr.bf16.mxu0 %v740
        %760 = vmatpush1.bf16.msra.mxu0 %v737
        %761 = vmatprep.subr.bf16.mxu0 0
        %762 = vmatpush2.bf16.msra.mxu0 0
        %763 = vmatprep.subr.bf16.mxu0 0
        %764 = vmatpush2.bf16.msra.mxu0 0
        %765 = vmatprep.subr.bf16.mxu0 0
        %766 = vmatpush2.bf16.msra.mxu0 0
        %767 = vmatprep.subr.bf16.mxu0 0
        %768 = vmatpush2.bf16.msra.mxu0 0
        %769 = vmatprep.subr.bf16.mxu0 0
        %770 = vmatpush2.bf16.msra.mxu0 0
        %771 = vmatprep.subr.bf16.mxu0 0
        %772 = vmatpush2.bf16.msra.mxu0 0
        %773 = vmatprep.subr.bf16.mxu0 0
        %774 = vmatpush2.bf16.msra.mxu0 0
        %775 = vmatprep.subr.bf16.mxu0 0
        %776 = vmatpush2.bf16.msra.mxu0 0
        %777 = vmatprep.mubr.bf16.mxu0 0
        %778 = vmatmul.mubr.bf16.gmra.mxu0 %v734
        %v779 = vpop.f32.mrf.mxu0
        %v780 = vadd.f32 0.0, %v779
        %v781 = vpop.f32.mrf.mxu0
        %v782 = vadd.f32 0.0, %v781
        %v783 = vpop.f32.mrf.mxu0
        %v784 = vpop.f32.mrf.mxu0
        %785 = vdwg.mxu0
        %786 = vmatprep.subr.bf16.mxu0 0
        %787 = vmatpush1.bf16.msra.mxu0 0
        %788 = vmatprep.subr.bf16.mxu0 0
        %789 = vmatpush1.bf16.msra.mxu0 0
        %790 = vmatprep.subr.bf16.mxu0 0
        %791 = vmatpush1.bf16.msra.mxu0 0
        %792 = vmatprep.subr.bf16.mxu0 0
        %793 = vmatpush1.bf16.msra.mxu0 0
        %794 = vmatprep.subr.bf16.mxu0 0
        %795 = vmatpush1.bf16.msra.mxu0 0
        %796 = vmatprep.subr.bf16.mxu0 0
        %797 = vmatpush1.bf16.msra.mxu0 0
        %798 = vmatprep.subr.bf16.mxu0 0
        %799 = vmatpush1.bf16.msra.mxu0 0
        %800 = vmatprep.subr.bf16.mxu0 0
        %801 = vmatpush1.bf16.msra.mxu0 %v743
        %802 = vmatprep.subr.bf16.mxu0 0
        %803 = vmatpush2.bf16.msra.mxu0 0
        %804 = vmatprep.subr.bf16.mxu0 0
        %805 = vmatpush2.bf16.msra.mxu0 0
        %806 = vmatprep.subr.bf16.mxu0 0
        %807 = vmatpush2.bf16.msra.mxu0 0
        %808 = vmatprep.subr.bf16.mxu0 0
        %809 = vmatpush2.bf16.msra.mxu0 0
        %810 = vmatprep.subr.bf16.mxu0 0
        %811 = vmatpush2.bf16.msra.mxu0 0
        %812 = vmatprep.subr.bf16.mxu0 0
        %813 = vmatpush2.bf16.msra.mxu0 0
        %814 = vmatprep.subr.bf16.mxu0 0
        %815 = vmatpush2.bf16.msra.mxu0 0
        %816 = vmatprep.subr.bf16.mxu0 0
        %817 = vmatpush2.bf16.msra.mxu0 0
        %818 = vmatprep.mubr.bf16.mxu0 0
        %819 = vmatmul.mubr.bf16.gmra.mxu0 %v734
        %v820 = vpop.f32.mrf.mxu0
        %v821 = vadd.f32 0.0, %v820
        %v822 = vpop.f32.mrf.mxu0
        %v823 = vpop.f32.mrf.mxu0
        %v824 = vpop.f32.mrf.mxu0
        %825 = vdwg.mxu0
        %v826 = vadd.f32 %v701, %v780
        %v827 = vadd.f32 %v702, %v782
        %v828 = vadd.f32 %v703, %v821
        %v829 = vld [vmem:[%s230] sm:$0x3f]
        %s830 = scalar_lea.vmem %s1, 20
        %v831 = vld [vmem:[%s830] sm:$0xf]
        %v833 = vcombine.high %v829, %v829
        %v835 = vunpack.c.l.s4 1983009808
        %v836 = vunpack.c.0.s8 %v835
        %v837 = vlaneseq
        %v838 = vshrl.u32 %v837, 7
        %v839 = vsub.s32 %v836, %v838
        %v840 = vrot.slane %v829, %v839
        %v842 = vunpack.c.l.s4 1983009808
        %v843 = vunpack.c.0.s8 %v842
        %v844 = vlaneseq
        %v845 = vshrl.u32 %v844, 7
        %v846 = vsub.s32 %v843, %v845
        %v847 = vrot.slane %v833, %v846
        %v848 = vcombine.high %v840, %v840
        %849 = vrot.lane.b32.xlu0 %v840, 108
        %v850 = vpop.permute.xlu0 %849
        %851 = vrot.lane.b32.xlu0 %v848, 108
        %v852 = vpop.permute.xlu0 %851
        %853 = vrot.lane.b32.xlu0 %v847, 108
        %v854 = vpop.permute.xlu0 %853
        %vm855 = vcmask 883712
        %v856 = vsel %vm855, %v850, %v852
        %v857 = vsel %vm855, %v852, %v854
        %v859 = vsel %vm266, %v831, 0
        %v862 = vsel %vm270, %v856, 0
        %v865 = vsel %vm270, %v857, 0
        %v868 = vsel %vm270, %v854, 0
        %870 = vmatprep.subr.bf16.mxu0 0
        %871 = vmatpush1.bf16.msra.mxu0 0
        %872 = vmatprep.subr.bf16.mxu0 0
        %873 = vmatpush1.bf16.msra.mxu0 0
        %874 = vmatprep.subr.bf16.mxu0 0
        %875 = vmatpush1.bf16.msra.mxu0 0
        %876 = vmatprep.subr.bf16.mxu0 0
        %877 = vmatpush1.bf16.msra.mxu0 0
        %878 = vmatprep.subr.bf16.mxu0 0
        %879 = vmatpush1.bf16.msra.mxu0 0
        %880 = vmatprep.subr.bf16.mxu0 0
        %881 = vmatpush1.bf16.msra.mxu0 0
        %882 = vmatprep.subr.bf16.mxu0 0
        %883 = vmatpush1.bf16.msra.mxu0 0
        %884 = vmatprep.subr.bf16.mxu0 %v865
        %885 = vmatpush1.bf16.msra.mxu0 %v862
        %886 = vmatprep.subr.bf16.mxu0 0
        %887 = vmatpush2.bf16.msra.mxu0 0
        %888 = vmatprep.subr.bf16.mxu0 0
        %889 = vmatpush2.bf16.msra.mxu0 0
        %890 = vmatprep.subr.bf16.mxu0 0
        %891 = vmatpush2.bf16.msra.mxu0 0
        %892 = vmatprep.subr.bf16.mxu0 0
        %893 = vmatpush2.bf16.msra.mxu0 0
        %894 = vmatprep.subr.bf16.mxu0 0
        %895 = vmatpush2.bf16.msra.mxu0 0
        %896 = vmatprep.subr.bf16.mxu0 0
        %897 = vmatpush2.bf16.msra.mxu0 0
        %898 = vmatprep.subr.bf16.mxu0 0
        %899 = vmatpush2.bf16.msra.mxu0 0
        %900 = vmatprep.subr.bf16.mxu0 0
        %901 = vmatpush2.bf16.msra.mxu0 0
        %902 = vmatprep.mubr.bf16.mxu0 0
        %903 = vmatmul.mubr.bf16.gmra.mxu0 %v859
        %v904 = vpop.f32.mrf.mxu0
        %v905 = vadd.f32 0.0, %v904
        %v906 = vpop.f32.mrf.mxu0
        %v907 = vadd.f32 0.0, %v906
        %v908 = vpop.f32.mrf.mxu0
        %v909 = vpop.f32.mrf.mxu0
        %910 = vdwg.mxu0
        %911 = vmatprep.subr.bf16.mxu0 0
        %912 = vmatpush1.bf16.msra.mxu0 0
        %913 = vmatprep.subr.bf16.mxu0 0
        %914 = vmatpush1.bf16.msra.mxu0 0
        %915 = vmatprep.subr.bf16.mxu0 0
        %916 = vmatpush1.bf16.msra.mxu0 0
        %917 = vmatprep.subr.bf16.mxu0 0
        %918 = vmatpush1.bf16.msra.mxu0 0
        %919 = vmatprep.subr.bf16.mxu0 0
        %920 = vmatpush1.bf16.msra.mxu0 0
        %921 = vmatprep.subr.bf16.mxu0 0
        %922 = vmatpush1.bf16.msra.mxu0 0
        %923 = vmatprep.subr.bf16.mxu0 0
        %924 = vmatpush1.bf16.msra.mxu0 0
        %925 = vmatprep.subr.bf16.mxu0 0
        %926 = vmatpush1.bf16.msra.mxu0 %v868
        %927 = vmatprep.subr.bf16.mxu0 0
        %928 = vmatpush2.bf16.msra.mxu0 0
        %929 = vmatprep.subr.bf16.mxu0 0
        %930 = vmatpush2.bf16.msra.mxu0 0
        %931 = vmatprep.subr.bf16.mxu0 0
        %932 = vmatpush2.bf16.msra.mxu0 0
        %933 = vmatprep.subr.bf16.mxu0 0
        %934 = vmatpush2.bf16.msra.mxu0 0
        %935 = vmatprep.subr.bf16.mxu0 0
        %936 = vmatpush2.bf16.msra.mxu0 0
        %937 = vmatprep.subr.bf16.mxu0 0
        %938 = vmatpush2.bf16.msra.mxu0 0
        %939 = vmatprep.subr.bf16.mxu0 0
        %940 = vmatpush2.bf16.msra.mxu0 0
        %941 = vmatprep.subr.bf16.mxu0 0
        %942 = vmatpush2.bf16.msra.mxu0 0
        %943 = vmatprep.mubr.bf16.mxu0 0
        %944 = vmatmul.mubr.bf16.gmra.mxu0 %v859
        %v945 = vpop.f32.mrf.mxu0
        %v946 = vadd.f32 0.0, %v945
        %v947 = vpop.f32.mrf.mxu0
        %v948 = vpop.f32.mrf.mxu0
        %v949 = vpop.f32.mrf.mxu0
        %950 = vdwg.mxu0
        %v951 = vadd.f32 %v826, %v905
        %v952 = vadd.f32 %v827, %v907
        %v953 = vadd.f32 %v828, %v946
        %v954 = vld [vmem:[%s230] sm:$0x3f]
        %s955 = scalar_lea.vmem %s1, 24
        %v956 = vld [vmem:[%s955] sm:$0xf]
        %v958 = vcombine.high %v954, %v954
        %v960 = vunpack.c.l.s4 1983009808
        %v961 = vunpack.c.0.s8 %v960
        %v962 = vlaneseq
        %v963 = vshrl.u32 %v962, 7
        %v964 = vsub.s32 %v961, %v963
        %v965 = vrot.slane %v954, %v964
        %v967 = vunpack.c.l.s4 1983009808
        %v968 = vunpack.c.0.s8 %v967
        %v969 = vlaneseq
        %v970 = vshrl.u32 %v969, 7
        %v971 = vsub.s32 %v968, %v970
        %v972 = vrot.slane %v958, %v971
        %v973 = vcombine.high %v965, %v965
        %974 = vrot.lane.b32.xlu0 %v965, 92
        %v975 = vpop.permute.xlu0 %974
        %976 = vrot.lane.b32.xlu0 %v973, 92
        %v977 = vpop.permute.xlu0 %976
        %978 = vrot.lane.b32.xlu0 %v972, 92
        %v979 = vpop.permute.xlu0 %978
        %vm980 = vcmask 752640
        %v981 = vsel %vm980, %v975, %v977
        %v982 = vsel %vm980, %v977, %v979
        %v984 = vsel %vm266, %v956, 0
        %v987 = vsel %vm270, %v981, 0
        %v990 = vsel %vm270, %v982, 0
        %v993 = vsel %vm270, %v979, 0
        %995 = vmatprep.subr.bf16.mxu0 0
        %996 = vmatpush1.bf16.msra.mxu0 0
        %997 = vmatprep.subr.bf16.mxu0 0
        %998 = vmatpush1.bf16.msra.mxu0 0
        %999 = vmatprep.subr.bf16.mxu0 0
        %1000 = vmatpush1.bf16.msra.mxu0 0
        %1001 = vmatprep.subr.bf16.mxu0 0
        %1002 = vmatpush1.bf16.msra.mxu0 0
        %1003 = vmatprep.subr.bf16.mxu0 0
        %1004 = vmatpush1.bf16.msra.mxu0 0
        %1005 = vmatprep.subr.bf16.mxu0 0
        %1006 = vmatpush1.bf16.msra.mxu0 0
        %1007 = vmatprep.subr.bf16.mxu0 0
        %1008 = vmatpush1.bf16.msra.mxu0 0
        %1009 = vmatprep.subr.bf16.mxu0 %v990
        %1010 = vmatpush1.bf16.msra.mxu0 %v987
        %1011 = vmatprep.subr.bf16.mxu0 0
        %1012 = vmatpush2.bf16.msra.mxu0 0
        %1013 = vmatprep.subr.bf16.mxu0 0
        %1014 = vmatpush2.bf16.msra.mxu0 0
        %1015 = vmatprep.subr.bf16.mxu0 0
        %1016 = vmatpush2.bf16.msra.mxu0 0
        %1017 = vmatprep.subr.bf16.mxu0 0
        %1018 = vmatpush2.bf16.msra.mxu0 0
        %1019 = vmatprep.subr.bf16.mxu0 0
        %1020 = vmatpush2.bf16.msra.mxu0 0
        %1021 = vmatprep.subr.bf16.mxu0 0
        %1022 = vmatpush2.bf16.msra.mxu0 0
        %1023 = vmatprep.subr.bf16.mxu0 0
        %1024 = vmatpush2.bf16.msra.mxu0 0
        %1025 = vmatprep.subr.bf16.mxu0 0
        %1026 = vmatpush2.bf16.msra.mxu0 0
        %1027 = vmatprep.mubr.bf16.mxu0 0
        %1028 = vmatmul.mubr.bf16.gmra.mxu0 %v984
        %v1029 = vpop.f32.mrf.mxu0
        %v1030 = vadd.f32 0.0, %v1029
        %v1031 = vpop.f32.mrf.mxu0
        %v1032 = vadd.f32 0.0, %v1031
        %v1033 = vpop.f32.mrf.mxu0
        %v1034 = vpop.f32.mrf.mxu0
        %1035 = vdwg.mxu0
        %1036 = vmatprep.subr.bf16.mxu0 0
        %1037 = vmatpush1.bf16.msra.mxu0 0
        %1038 = vmatprep.subr.bf16.mxu0 0
        %1039 = vmatpush1.bf16.msra.mxu0 0
        %1040 = vmatprep.subr.bf16.mxu0 0
        %1041 = vmatpush1.bf16.msra.mxu0 0
        %1042 = vmatprep.subr.bf16.mxu0 0
        %1043 = vmatpush1.bf16.msra.mxu0 0
        %1044 = vmatprep.subr.bf16.mxu0 0
        %1045 = vmatpush1.bf16.msra.mxu0 0
        %1046 = vmatprep.subr.bf16.mxu0 0
        %1047 = vmatpush1.bf16.msra.mxu0 0
        %1048 = vmatprep.subr.bf16.mxu0 0
        %1049 = vmatpush1.bf16.msra.mxu0 0
        %1050 = vmatprep.subr.bf16.mxu0 0
        %1051 = vmatpush1.bf16.msra.mxu0 %v993
        %1052 = vmatprep.subr.bf16.mxu0 0
        %1053 = vmatpush2.bf16.msra.mxu0 0
        %1054 = vmatprep.subr.bf16.mxu0 0
        %1055 = vmatpush2.bf16.msra.mxu0 0
        %1056 = vmatprep.subr.bf16.mxu0 0
        %1057 = vmatpush2.bf16.msra.mxu0 0
        %1058 = vmatprep.subr.bf16.mxu0 0
        %1059 = vmatpush2.bf16.msra.mxu0 0
        %1060 = vmatprep.subr.bf16.mxu0 0
        %1061 = vmatpush2.bf16.msra.mxu0 0
        %1062 = vmatprep.subr.bf16.mxu0 0
        %1063 = vmatpush2.bf16.msra.mxu0 0
        %1064 = vmatprep.subr.bf16.mxu0 0
        %1065 = vmatpush2.bf16.msra.mxu0 0
        %1066 = vmatprep.subr.bf16.mxu0 0
        %1067 = vmatpush2.bf16.msra.mxu0 0
        %1068 = vmatprep.mubr.bf16.mxu0 0
        %1069 = vmatmul.mubr.bf16.gmra.mxu0 %v984
        %v1070 = vpop.f32.mrf.mxu0
        %v1071 = vadd.f32 0.0, %v1070
        %v1072 = vpop.f32.mrf.mxu0
        %v1073 = vpop.f32.mrf.mxu0
        %v1074 = vpop.f32.mrf.mxu0
        %1075 = vdwg.mxu0
        %v1076 = vadd.f32 %v951, %v1030
        %v1077 = vadd.f32 %v952, %v1032
        %v1078 = vadd.f32 %v953, %v1071
        %v1079 = vld [vmem:[%s230] sm:$0x3f]
        %s1080 = scalar_lea.vmem %s1, 28
        %v1081 = vld [vmem:[%s1080] sm:$0xf]
        %v1083 = vcombine.high %v1079, %v1079
        %v1085 = vunpack.c.l.s4 1983009808
        %v1086 = vunpack.c.0.s8 %v1085
        %v1087 = vlaneseq
        %v1088 = vshrl.u32 %v1087, 7
        %v1089 = vsub.s32 %v1086, %v1088
        %v1090 = vrot.slane %v1079, %v1089
        %v1092 = vunpack.c.l.s4 1983009808
        %v1093 = vunpack.c.0.s8 %v1092
        %v1094 = vlaneseq
        %v1095 = vshrl.u32 %v1094, 7
        %v1096 = vsub.s32 %v1093, %v1095
        %v1097 = vrot.slane %v1083, %v1096
        %v1098 = vcombine.high %v1090, %v1090
        %1099 = vrot.lane.b32.xlu0 %v1090, 91
        %v1100 = vpop.permute.xlu0 %1099
        %1101 = vrot.lane.b32.xlu0 %v1098, 91
        %v1102 = vpop.permute.xlu0 %1101
        %1103 = vrot.lane.b32.xlu0 %v1097, 91
        %v1104 = vpop.permute.xlu0 %1103
        %vm1105 = vcmask 744448
        %v1106 = vsel %vm1105, %v1100, %v1102
        %v1107 = vsel %vm1105, %v1102, %v1104
        %v1109 = vsel %vm266, %v1081, 0
        %v1112 = vsel %vm270, %v1106, 0
        %v1115 = vsel %vm270, %v1107, 0
        %v1118 = vsel %vm270, %v1104, 0
        %1120 = vmatprep.subr.bf16.mxu0 0
        %1121 = vmatpush1.bf16.msra.mxu0 0
        %1122 = vmatprep.subr.bf16.mxu0 0
        %1123 = vmatpush1.bf16.msra.mxu0 0
        %1124 = vmatprep.subr.bf16.mxu0 0
        %1125 = vmatpush1.bf16.msra.mxu0 0
        %1126 = vmatprep.subr.bf16.mxu0 0
        %1127 = vmatpush1.bf16.msra.mxu0 0
        %1128 = vmatprep.subr.bf16.mxu0 0
        %1129 = vmatpush1.bf16.msra.mxu0 0
        %1130 = vmatprep.subr.bf16.mxu0 0
        %1131 = vmatpush1.bf16.msra.mxu0 0
        %1132 = vmatprep.subr.bf16.mxu0 0
        %1133 = vmatpush1.bf16.msra.mxu0 0
        %1134 = vmatprep.subr.bf16.mxu0 %v1115
        %1135 = vmatpush1.bf16.msra.mxu0 %v1112
        %1136 = vmatprep.subr.bf16.mxu0 0
        %1137 = vmatpush2.bf16.msra.mxu0 0
        %1138 = vmatprep.subr.bf16.mxu0 0
        %1139 = vmatpush2.bf16.msra.mxu0 0
        %1140 = vmatprep.subr.bf16.mxu0 0
        %1141 = vmatpush2.bf16.msra.mxu0 0
        %1142 = vmatprep.subr.bf16.mxu0 0
        %1143 = vmatpush2.bf16.msra.mxu0 0
        %1144 = vmatprep.subr.bf16.mxu0 0
        %1145 = vmatpush2.bf16.msra.mxu0 0
        %1146 = vmatprep.subr.bf16.mxu0 0
        %1147 = vmatpush2.bf16.msra.mxu0 0
        %1148 = vmatprep.subr.bf16.mxu0 0
        %1149 = vmatpush2.bf16.msra.mxu0 0
        %1150 = vmatprep.subr.bf16.mxu0 0
        %1151 = vmatpush2.bf16.msra.mxu0 0
        %1152 = vmatprep.mubr.bf16.mxu0 0
        %1153 = vmatmul.mubr.bf16.gmra.mxu0 %v1109
        %v1154 = vpop.f32.mrf.mxu0
        %v1155 = vadd.f32 0.0, %v1154
        %v1156 = vpop.f32.mrf.mxu0
        %v1157 = vadd.f32 0.0, %v1156
        %v1158 = vpop.f32.mrf.mxu0
        %v1159 = vpop.f32.mrf.mxu0
        %1160 = vdwg.mxu0
        %1161 = vmatprep.subr.bf16.mxu0 0
        %1162 = vmatpush1.bf16.msra.mxu0 0
        %1163 = vmatprep.subr.bf16.mxu0 0
        %1164 = vmatpush1.bf16.msra.mxu0 0
        %1165 = vmatprep.subr.bf16.mxu0 0
        %1166 = vmatpush1.bf16.msra.mxu0 0
        %1167 = vmatprep.subr.bf16.mxu0 0
        %1168 = vmatpush1.bf16.msra.mxu0 0
        %1169 = vmatprep.subr.bf16.mxu0 0
        %1170 = vmatpush1.bf16.msra.mxu0 0
        %1171 = vmatprep.subr.bf16.mxu0 0
        %1172 = vmatpush1.bf16.msra.mxu0 0
        %1173 = vmatprep.subr.bf16.mxu0 0
        %1174 = vmatpush1.bf16.msra.mxu0 0
        %1175 = vmatprep.subr.bf16.mxu0 0
        %1176 = vmatpush1.bf16.msra.mxu0 %v1118
        %1177 = vmatprep.subr.bf16.mxu0 0
        %1178 = vmatpush2.bf16.msra.mxu0 0
        %1179 = vmatprep.subr.bf16.mxu0 0
        %1180 = vmatpush2.bf16.msra.mxu0 0
        %1181 = vmatprep.subr.bf16.mxu0 0
        %1182 = vmatpush2.bf16.msra.mxu0 0
        %1183 = vmatprep.subr.bf16.mxu0 0
        %1184 = vmatpush2.bf16.msra.mxu0 0
        %1185 = vmatprep.subr.bf16.mxu0 0
        %1186 = vmatpush2.bf16.msra.mxu0 0
        %1187 = vmatprep.subr.bf16.mxu0 0
        %1188 = vmatpush2.bf16.msra.mxu0 0
        %1189 = vmatprep.subr.bf16.mxu0 0
        %1190 = vmatpush2.bf16.msra.mxu0 0
        %1191 = vmatprep.subr.bf16.mxu0 0
        %1192 = vmatpush2.bf16.msra.mxu0 0
        %1193 = vmatprep.mubr.bf16.mxu0 0
        %1194 = vmatmul.mubr.bf16.gmra.mxu0 %v1109
        %v1195 = vpop.f32.mrf.mxu0
        %v1196 = vadd.f32 0.0, %v1195
        %v1197 = vpop.f32.mrf.mxu0
        %v1198 = vpop.f32.mrf.mxu0
        %v1199 = vpop.f32.mrf.mxu0
        %1200 = vdwg.mxu0
        %v1201 = vadd.f32 %v1076, %v1155
        %v1202 = vadd.f32 %v1077, %v1157
        %v1203 = vadd.f32 %v1078, %v1196
        %v1204 = vld [vmem:[%s230] sm:$0x3f]
        %s1205 = scalar_lea.vmem %s1, 32
        %v1206 = vld [vmem:[%s1205] sm:$0xf]
        %v1208 = vcombine.high %v1204, %v1204
        %v1210 = vunpack.c.l.s4 1983009808
        %v1211 = vunpack.c.0.s8 %v1210
        %v1212 = vlaneseq
        %v1213 = vshrl.u32 %v1212, 7
        %v1214 = vsub.s32 %v1211, %v1213
        %v1215 = vrot.slane %v1204, %v1214
        %v1217 = vunpack.c.l.s4 1983009808
        %v1218 = vunpack.c.0.s8 %v1217
        %v1219 = vlaneseq
        %v1220 = vshrl.u32 %v1219, 7
        %v1221 = vsub.s32 %v1218, %v1220
        %v1222 = vrot.slane %v1208, %v1221
        %v1223 = vcombine.high %v1215, %v1215
        %1224 = vrot.lane.b32.xlu0 %v1215, 90
        %v1225 = vpop.permute.xlu0 %1224
        %1226 = vrot.lane.b32.xlu0 %v1223, 90
        %v1227 = vpop.permute.xlu0 %1226
        %1228 = vrot.lane.b32.xlu0 %v1222, 90
        %v1229 = vpop.permute.xlu0 %1228
        %vm1230 = vcmask 736256
        %v1231 = vsel %vm1230, %v1225, %v1227
        %v1232 = vsel %vm1230, %v1227, %v1229
        %v1234 = vsel %vm266, %v1206, 0
        %v1237 = vsel %vm270, %v1231, 0
        %v1240 = vsel %vm270, %v1232, 0
        %v1243 = vsel %vm270, %v1229, 0
        %1245 = vmatprep.subr.bf16.mxu0 0
        %1246 = vmatpush1.bf16.msra.mxu0 0
        %1247 = vmatprep.subr.bf16.mxu0 0
        %1248 = vmatpush1.bf16.msra.mxu0 0
        %1249 = vmatprep.subr.bf16.mxu0 0
        %1250 = vmatpush1.bf16.msra.mxu0 0
        %1251 = vmatprep.subr.bf16.mxu0 0
        %1252 = vmatpush1.bf16.msra.mxu0 0
        %1253 = vmatprep.subr.bf16.mxu0 0
        %1254 = vmatpush1.bf16.msra.mxu0 0
        %1255 = vmatprep.subr.bf16.mxu0 0
        %1256 = vmatpush1.bf16.msra.mxu0 0
        %1257 = vmatprep.subr.bf16.mxu0 0
        %1258 = vmatpush1.bf16.msra.mxu0 0
        %1259 = vmatprep.subr.bf16.mxu0 %v1240
        %1260 = vmatpush1.bf16.msra.mxu0 %v1237
        %1261 = vmatprep.subr.bf16.mxu0 0
        %1262 = vmatpush2.bf16.msra.mxu0 0
        %1263 = vmatprep.subr.bf16.mxu0 0
        %1264 = vmatpush2.bf16.msra.mxu0 0
        %1265 = vmatprep.subr.bf16.mxu0 0
        %1266 = vmatpush2.bf16.msra.mxu0 0
        %1267 = vmatprep.subr.bf16.mxu0 0
        %1268 = vmatpush2.bf16.msra.mxu0 0
        %1269 = vmatprep.subr.bf16.mxu0 0
        %1270 = vmatpush2.bf16.msra.mxu0 0
        %1271 = vmatprep.subr.bf16.mxu0 0
        %1272 = vmatpush2.bf16.msra.mxu0 0
        %1273 = vmatprep.subr.bf16.mxu0 0
        %1274 = vmatpush2.bf16.msra.mxu0 0
        %1275 = vmatprep.subr.bf16.mxu0 0
        %1276 = vmatpush2.bf16.msra.mxu0 0
        %1277 = vmatprep.mubr.bf16.mxu0 0
        %1278 = vmatmul.mubr.bf16.gmra.mxu0 %v1234
        %v1279 = vpop.f32.mrf.mxu0
        %v1280 = vadd.f32 0.0, %v1279
        %v1281 = vpop.f32.mrf.mxu0
        %v1282 = vadd.f32 0.0, %v1281
        %v1283 = vpop.f32.mrf.mxu0
        %v1284 = vpop.f32.mrf.mxu0
        %1285 = vdwg.mxu0
        %1286 = vmatprep.subr.bf16.mxu0 0
        %1287 = vmatpush1.bf16.msra.mxu0 0
        %1288 = vmatprep.subr.bf16.mxu0 0
        %1289 = vmatpush1.bf16.msra.mxu0 0
        %1290 = vmatprep.subr.bf16.mxu0 0
        %1291 = vmatpush1.bf16.msra.mxu0 0
        %1292 = vmatprep.subr.bf16.mxu0 0
        %1293 = vmatpush1.bf16.msra.mxu0 0
        %1294 = vmatprep.subr.bf16.mxu0 0
        %1295 = vmatpush1.bf16.msra.mxu0 0
        %1296 = vmatprep.subr.bf16.mxu0 0
        %1297 = vmatpush1.bf16.msra.mxu0 0
        %1298 = vmatprep.subr.bf16.mxu0 0
        %1299 = vmatpush1.bf16.msra.mxu0 0
        %1300 = vmatprep.subr.bf16.mxu0 0
        %1301 = vmatpush1.bf16.msra.mxu0 %v1243
        %1302 = vmatprep.subr.bf16.mxu0 0
        %1303 = vmatpush2.bf16.msra.mxu0 0
        %1304 = vmatprep.subr.bf16.mxu0 0
        %1305 = vmatpush2.bf16.msra.mxu0 0
        %1306 = vmatprep.subr.bf16.mxu0 0
        %1307 = vmatpush2.bf16.msra.mxu0 0
        %1308 = vmatprep.subr.bf16.mxu0 0
        %1309 = vmatpush2.bf16.msra.mxu0 0
        %1310 = vmatprep.subr.bf16.mxu0 0
        %1311 = vmatpush2.bf16.msra.mxu0 0
        %1312 = vmatprep.subr.bf16.mxu0 0
        %1313 = vmatpush2.bf16.msra.mxu0 0
        %1314 = vmatprep.subr.bf16.mxu0 0
        %1315 = vmatpush2.bf16.msra.mxu0 0
        %1316 = vmatprep.subr.bf16.mxu0 0
        %1317 = vmatpush2.bf16.msra.mxu0 0
        %1318 = vmatprep.mubr.bf16.mxu0 0
        %1319 = vmatmul.mubr.bf16.gmra.mxu0 %v1234
        %v1320 = vpop.f32.mrf.mxu0
        %v1321 = vadd.f32 0.0, %v1320
        %v1322 = vpop.f32.mrf.mxu0
        %v1323 = vpop.f32.mrf.mxu0
        %v1324 = vpop.f32.mrf.mxu0
        %1325 = vdwg.mxu0
        %v1326 = vadd.f32 %v1201, %v1280
        %v1327 = vadd.f32 %v1202, %v1282
        %v1328 = vadd.f32 %v1203, %v1321
        %v1329 = vld [vmem:[%s2] sm:$0x7]
        %v1331 = vlaneseq
        %v1332 = vshrl.u32 %v1331, 7
        %v1333 = vsub.s32 0, %v1332
        %v1334 = vrot.slane %v1329, %v1333
        %v1335 = vlaneseq
        %v1336 = vshrl.u32 %v1335, 7
        %v1337 = vsub.s32 1, %v1336
        %v1338 = vrot.slane %v1329, %v1337
        %v1339 = vlaneseq
        %v1340 = vshrl.u32 %v1339, 7
        %v1341 = vsub.s32 2, %v1340
        %v1342 = vrot.slane %v1329, %v1341
        %v1346 = vmul.f32 %v1326, %v1334
        %v1347 = vmul.f32 %v1327, %v1338
        %v1348 = vmul.f32 %v1328, %v1342
        %v1349 = vpack.c.bf16 %v1346, %v1346
        %v1350 = vpack.c.bf16 %v1347, %v1347
        %v1351 = vpack.c.bf16 %v1348, %v1348
        %v1355 = vunpack.c.l.b16 %v1349
        %v1356 = vunpack.c.l.b16 %v1350
        %v1357 = vunpack.c.l.b16 %v1351
        %v1358 = vpack.c.b16 %v1356, %v1355
        %v1359 = vpack.c.b16 %v1357, %v1357
        %1362 = vst [vmem:[%s215] sm:$0xff] %v1358
        %vm1363 = vcmask 257024
        %1364 = vst.msk [vmem:[%s215 + $0x8] sm:$0xf] %vm1363, %v1359
        %v1365 = vadd.f32 %v1346, %v1347
        %vm1366 = vcmask 261120
        %v1367 = vsel %vm1366, %v1348, 0.0
        %v1368 = vadd.f32 %v1365, %v1367
        %1369 = vadd.xlane.f32.xlu0 %v1368
        %v1370 = vpop.xlane.xlu0 %1369
        %v1371 = vmul.f32 %v1346, %v1346
        %v1372 = vmul.f32 %v1347, %v1347
        %v1373 = vmul.f32 %v1348, %v1348
        %v1374 = vadd.f32 %v1371, %v1372
        %v1375 = vsel %vm1366, %v1373, 0.0
        %v1376 = vadd.f32 %v1374, %v1375
        %1377 = vadd.xlane.f32.xlu0 %v1376
        %v1378 = vpop.xlane.xlu0 %1377
        %vm1379 = vcmask 7168
        %v1380 = vsel %vm1379, %v1370, %v1378
        %p1381 = scmp.eq.s32.totalorder %s24, 0
        // Predicated region
        $region33: #{tpu_custom_call.1} parent=31 // pred_check
          %p1382 = pneg %p1381
        $region34: #{tpu_custom_call.1} parent=31 // pred_check_branch
          %1384 = sbr.rel (%p1382) target = $region36
        $region35: #{tpu_custom_call.1} parent=31 // pred_region
          %vm1385 = vcmask 15360
          %1386 = vst.msk [vmem:[%s234] sm:$0xff] %vm1385, 0.0
        $region36: #{tpu_custom_call.1} parent=31 // pred_fallthru
          _
        %v1387 = vld [vmem:[%s234] sm:$0xff]
        %v1388 = vadd.f32 %v1387, %v1380
        %vm1389 = vcmask 15360
        %1390 = vst.msk [vmem:[%s234] sm:$0xff] %vm1389, %v1388
        %s1391 = sand.u32 %s111, 1
        %s1392 = scalar_lea.sflag [#allocation3], %s1391
        %s1393 = sand.u32 %s111, 1
        %s1394 = smul.addr %s1393, 12
        %s1395 = scalar_lea.vmem [#allocation2], %s1394
        %p1396 = scmp.lt.s32.totalorder %s23, 1
        %s1397 = scalar_select %p1396, %s23, 1
        %s1398 = smul.addr %s1397, 8
        %s1399 = scalar_lea.vmem %s4, %s1398
        // Predicated region
        $region37: #{tpu_custom_call.1} parent=31 // pred_check
          %p1400 = pneg %p121
        $region38: #{tpu_custom_call.1} parent=31 // pred_check_branch
          %1402 = sbr.rel (%p1400) target = $region40
        $region39: #{tpu_custom_call.1} parent=31 // pred_region
          %s1404 = ssub.s32 192, 192
          %1405 = vsyncadd %s1392, %s1404
          %s1406 = smul.addr %s24, 3
          %s1407 = smul.addr %s23, 3
          %s1408 = sadd.s32 %s1406, %s1407
          %s1409 = smul.addr %s1408, 64
          %s1410 = scalar_lea.hbm %s3, %s1409
          %s1412 = sshll.u32 %s1395, 4
          %s1413 = int_to_ptr.vmem [resolvable:$true] %s1412
          %1415 = dma.vmem_to_hbm [thread:$0]  %s1413, 192, %s1410, %s1392
        $region40: #{tpu_custom_call.1} parent=31 // pred_fallthru
          _
        // Predicated region
        $region41: #{tpu_custom_call.1} parent=31 // pred_check
          %p1416 = pneg %p147
        $region42: #{tpu_custom_call.1} parent=31 // pred_check_branch
          %1418 = sbr.rel (%p1416) target = $region44
        $region43: #{tpu_custom_call.1} parent=31 // pred_region
          _
        $region44: #{tpu_custom_call.1} parent=31 // pred_fallthru
          _
      $region32: #{tpu_custom_call.1} parent=5 // pred_fallthru
        _
      %p1419 = scmp.le.s32.totalorder 2, %s14
      // Predicated region
      $region45: #{tpu_custom_call.1} parent=5 // pred_check
        %p1420 = pneg %p1419
      $region46: #{tpu_custom_call.1} parent=5 // pred_check_branch
        %1422 = sbr.rel (%p1420) target = $region48
      $region47: #{tpu_custom_call.1} parent=5 // pred_region
        %s1423 = ssub.s32 %s14, 2
        // Predicated region
        $region49: #{tpu_custom_call.1} parent=47 // pred_check
          %p1424 = pneg %p127
        $region50: #{tpu_custom_call.1} parent=47 // pred_check_branch
          %1426 = sbr.rel (%p1424) target = $region52
        $region51: #{tpu_custom_call.1} parent=47 // pred_region
          %s1427 = sand.u32 %s112, 1
          %s1428 = scalar_lea.sflag [#allocation3], %s1427
          %s1429 = sand.u32 %s112, 1
          %s1430 = smul.addr %s1429, 12
          %s1431 = scalar_lea.vmem [#allocation2], %s1430
          %1432 = dma.done %s1428, 192
        $region52: #{tpu_custom_call.1} parent=47 // pred_fallthru
          _
        // Predicated region
        $region53: #{tpu_custom_call.1} parent=47 // pred_check
          %p1433 = pneg %p153
        $region54: #{tpu_custom_call.1} parent=47 // pred_check_branch
          %1435 = sbr.rel (%p1433) target = $region56
        $region55: #{tpu_custom_call.1} parent=47 // pred_region
          %p1436 = scmp.lt.s32.totalorder %s25, 1
          %s1437 = scalar_select %p1436, %s25, 1
          %s1438 = smul.addr %s1437, 8
          %s1439 = scalar_lea.vmem %s4, %s1438
        $region56: #{tpu_custom_call.1} parent=47 // pred_fallthru
          _
      $region48: #{tpu_custom_call.1} parent=5 // pred_fallthru
        _
    $region6: #{tpu_custom_call.1} parent=1 // loop_footer
      %s18 = sadd.s32 1, %s14
    $region7: #{tpu_custom_call.1} parent=1 // loop_footer_branch
      %13 = sbr.rel target = $region3
    $region8: #{tpu_custom_call.1} parent=1 // loop_exit
      _
    %1440 = vsyncpa [#allocation3], 1
    %s1441 = scalar_lea.sflag [#allocation3], 1
    %1442 = vsyncpa %s1441, 1

</llo_original>
